<compile_context>
chip_gen: v5e
topology: v5e:2x2
jax: 0.10.0
libtpu: 0.0.40
codegen_flags: <defaults>
</compile_context>

<pallas_src>
import functools

import jax
import jax.numpy as jnp
from jax import lax
from jax.experimental import pallas as pl
from jax.experimental.pallas import tpu as pltpu

BN_EPS = 1e-5
LANE = 128
VMEM_LIMIT = 48 * 1024 * 1024


def _round_up(x, m):
    return (x + m - 1) // m * m


def _pick_row_tile(n, target):
    t = max(1, min(target, n))
    while n % t:
        t -= 1
    return t


# ----------------------------- Pallas kernels ------------------------------ #

def _conv1_bn_relu_kernel(x_ref, w_ref, s1_ref, b1_ref, s2_ref, b2_ref, o_ref, a_sc,
                          *, G, H, W, TR, Wo, Cpi, Cpo):
    """h = relu(BN2(conv3x3_stride_G(relu(BN1(x))))) for one (image, row-tile)."""
    # x_ref : (1, Hs, Ws, G*G*Cpi) f32  -- raw x, zero-padded + space-to-depth(G)
    # w_ref : (9, Cpi, Cpo)        bf16 -- conv1 weight, (dy, dx) major
    # s1/b1 : (1, Cpi) f32  folded BN1 ; s2/b2 : (1, Cpo) f32 folded BN2
    # o_ref : (1, TR, Wo, Cpo) bf16
    # a_sc  : (G*G, Hs, Ws, Cpi) bf16 VMEM scratch holding a = relu(BN1(x)) (0 at pad)
    r = pl.program_id(1)
    _, Hs, Ws, _ = x_ref.shape
    s1 = s1_ref[...]
    b1 = b1_ref[...]

    # Prologue: a = relu(BN1(x)); re-impose the conv zero padding after the affine+relu.
    for g in range(G * G):
        gi, gj = g // G, g % G
        xg = x_ref[0, :, :, g * Cpi:(g + 1) * Cpi]                      # (Hs, Ws, Cpi) f32
        ag = jnp.maximum(xg * s1 + b1, 0.0)
        ri = lax.broadcasted_iota(jnp.int32, (Hs, Ws, Cpi), 0) * G + gi  # padded row index
        ci = lax.broadcasted_iota(jnp.int32, (Hs, Ws, Cpi), 1) * G + gj  # padded col index
        inside = (ri >= 1) & (ri <= H) & (ci >= 1) & (ci <= W)
        a_sc[g] = jnp.where(inside, ag, 0.0).astype(jnp.bfloat16)

    # conv3x3 as 9 shifted (rows, Cpi) @ (Cpi, Cpo) MXU matmuls, f32 accumulation.
    y0 = r * TR
    acc = jnp.zeros((TR * Wo, Cpo), jnp.float32)
    for dy in range(3):
        for dx in range(3):
            g = (dy % G) * G + (dx % G)
            blk = a_sc[g, pl.ds(y0 + dy // G, TR), pl.ds(dx // G, Wo), :]
            acc = acc + jnp.dot(blk.reshape(TR * Wo, Cpi), w_ref[3 * dy + dx],
                                preferred_element_type=jnp.float32)

    h = jnp.maximum(acc * s2_ref[...] + b2_ref[...], 0.0)               # BN2 + ReLU epilogue
    o_ref[0] = h.reshape(TR, Wo, Cpo).astype(o_ref.dtype)


def _conv2_add_id_kernel(hp_ref, w_ref, xs_ref, o_ref, *, TR, Wo, Cpo):
    """out = conv3x3_s1(h) + x   (equal in/out channels, identity shortcut)."""
    r = pl.program_id(1)
    y0 = r * TR
    acc = jnp.zeros((TR * Wo, Cpo), jnp.float32)
    for dy in range(3):
        for dx in range(3):
            blk = hp_ref[0, pl.ds(y0 + dy, TR), pl.ds(dx, Wo), :]
            acc = acc + jnp.dot(blk.reshape(TR * Wo, Cpo), w_ref[3 * dy + dx],
                                preferred_element_type=jnp.float32)
    o_ref[0] = acc.reshape(TR, Wo, Cpo) + xs_ref[0]


def _conv2_add_proj_kernel(hp_ref, w_ref, xs2d_ref, s1_ref, b1_ref, wsc_ref, o_ref,
                           *, G, TR, Wo, Cpi, Cpo):
    """out = conv3x3_s1(h) + conv1x1_strideG(relu(BN1(x)))."""
    r = pl.program_id(1)
    y0 = r * TR
    acc = jnp.zeros((TR * Wo, Cpo), jnp.float32)
    for dy in range(3):
        for dx in range(3):
            blk = hp_ref[0, pl.ds(y0 + dy, TR), pl.ds(dx, Wo), :]
            acc = acc + jnp.dot(blk.reshape(TR * Wo, Cpo), w_ref[3 * dy + dx],
                                preferred_element_type=jnp.float32)

    # 1x1 stride-G projection shortcut; its sample points are always interior,
    # so no pad-masking is needed.  Read strided samples straight from the
    # space-to-depth input (no extra HBM gather).
    off = 1 // G                      # 1 for stride 1, 0 for stride >= 2
    g = (1 % G) * G + (1 % G)         # parity block containing the sampled points
    xsl = xs2d_ref[0, pl.ds(y0 + off, TR), pl.ds(off, Wo), g * Cpi:(g + 1) * Cpi]
    a_sl = jnp.maximum(xsl * s1_ref[...] + b1_ref[...], 0.0).astype(jnp.bfloat16)
    acc = acc + jnp.dot(a_sl.reshape(TR * Wo, Cpi), wsc_ref[...],
                        preferred_element_type=jnp.float32)
    o_ref[0] = acc.reshape(TR, Wo, Cpo)


# ------------------------------- glue (JAX) -------------------------------- #

def _fold_bn(gamma, beta, mean, var):
    s = gamma * lax.rsqrt(var + BN_EPS)
    return s, beta - mean * s


def _pad_last(x, target):
    pad = target - x.shape[-1]
    if pad == 0:
        return x
    return jnp.pad(x, [(0, 0)] * (x.ndim - 1) + [(0, pad)])


def _space_to_depth(x_pad, G):
    """(N, Hp, Wp, C) -> (N, Hp/G, Wp/G, G*G*C), block g = gi*G + gj."""
    N, Hp, Wp, C = x_pad.shape
    Hp2, Wp2 = _round_up(Hp, G), _round_up(Wp, G)
    if (Hp2, Wp2) != (Hp, Wp):
        x_pad = jnp.pad(x_pad, ((0, 0), (0, Hp2 - Hp), (0, Wp2 - Wp), (0, 0)))
    x = x_pad.reshape(N, Hp2 // G, G, Wp2 // G, G, C)
    x = jnp.transpose(x, (0, 1, 3, 2, 4, 5))
    return x.reshape(N, Hp2 // G, Wp2 // G, G * G * C)


def _conv_weight(w_oihw, Cpi, Cpo):
    """(Cout, Cin, kh, kw) -> (kh*kw, Cpi, Cpo) bf16, (dy, dx) major, zero padded."""
    co, ci, kh, kw = w_oihw.shape
    w = jnp.transpose(w_oihw, (2, 3, 1, 0))
    w = jnp.pad(w, ((0, 0), (0, 0), (0, Cpi - ci), (0, Cpo - co)))
    return w.reshape(kh * kw, Cpi, Cpo).astype(jnp.bfloat16)


def init_wrn_block_params(key, in_planes, out_planes):
    ks = jax.random.split(key, 11)
    p = {
        "bn1_gamma": 1.0 + 0.1 * jax.random.normal(ks[0], (in_planes,), jnp.float32),
        "bn1_beta": 0.1 * jax.random.normal(ks[1], (in_planes,), jnp.float32),
        "bn1_mean": 0.1 * jax.random.normal(ks[2], (in_planes,), jnp.float32),
        "bn1_var": jax.random.uniform(ks[3], (in_planes,), jnp.float32, 0.5, 1.5),
        "w1": jax.random.normal(ks[4], (out_planes, in_planes, 3, 3), jnp.float32)
        * (2.0 / (9 * in_planes)) ** 0.5,
        "bn2_gamma": 1.0 + 0.1 * jax.random.normal(ks[5], (out_planes,), jnp.float32),
        "bn2_beta": 0.1 * jax.random.normal(ks[6], (out_planes,), jnp.float32),
        "bn2_mean": 0.1 * jax.random.normal(ks[7], (out_planes,), jnp.float32),
        "bn2_var": jax.random.uniform(ks[8], (out_planes,), jnp.float32, 0.5, 1.5),
        "w2": jax.random.normal(ks[9], (out_planes, out_planes, 3, 3), jnp.float32)
        * (2.0 / (9 * out_planes)) ** 0.5,
    }
    if in_planes != out_planes:
        p["wsc"] = jax.random.normal(ks[10], (out_planes, in_planes, 1, 1), jnp.float32) \
            * (2.0 / in_planes) ** 0.5
    return p


def wrn_block_forward(x_nchw, params, in_planes, out_planes, stride, drop_rate=0.0,
                      row_tile=8):
    """Pallas implementation of WRNBlock.forward (eval-mode BN)."""
    # TODO(synk): training-mode dropout (drop_rate > 0) and training-mode BN batch
    # statistics are not implemented; eval-mode semantics are used.
    N, C, H, W = x_nchw.shape
    assert C == in_planes
    equal = in_planes == out_planes
    if equal:
        assert stride == 1, "identity shortcut requires stride == 1"
    G = stride
    Cpi = _round_up(in_planes, LANE)
    Cpo = _round_up(out_planes, LANE)

    x = jnp.transpose(x_nchw, (0, 2, 3, 1)).astype(jnp.float32)          # NHWC
    x = _pad_last(x, Cpi)                                                # lane-dense channels

    s1, b1 = _fold_bn(params["bn1_gamma"], params["bn1_beta"],
                      params["bn1_mean"], params["bn1_var"])
    s2, b2 = _fold_bn(params["bn2_gamma"], params["bn2_beta"],
                      params["bn2_mean"], params["bn2_var"])
    s1p = _pad_last(s1, Cpi).reshape(1, Cpi)
    b1p = _pad_last(b1, Cpi).reshape(1, Cpi)
    s2p = _pad_last(s2, Cpo).reshape(1, Cpo)
    b2p = _pad_last(b2, Cpo).reshape(1, Cpo)

    # Conv zero-padding + space-to-depth by the stride: every 3x3 tap becomes a
    # contiguous slice inside the kernel (no 9x im2col materialized in HBM).
    x_pad = jnp.pad(x, ((0, 0), (1, 1), (1, 1), (0, 0)))
    x_s2d = _space_to_depth(x_pad, G)
    _, Hs, Ws, _ = x_s2d.shape

    Ho = (H + 2 - 3) // stride + 1
    Wo = (W + 2 - 3) // stride + 1
    TR = _pick_row_tile(Ho, row_tile)
    R = Ho // TR

    w1m = _conv_weight(params["w1"], Cpi, Cpo)
    cparams = pltpu.CompilerParams(dimension_semantics=("parallel", "arbitrary"),
                                   vmem_limit_bytes=VMEM_LIMIT)

    # ---- kernel 1: relu(BN2(conv1(relu(BN1(x))))) ---- #
    kernel1 = functools.partial(_conv1_bn_relu_kernel, G=G, H=H, W=W,
                                TR=TR, Wo=Wo, Cpi=Cpi, Cpo=Cpo)
    h = pl.pallas_call(
        kernel1,
        out_shape=jax.ShapeDtypeStruct((N, Ho, Wo, Cpo), jnp.bfloat16),
        grid=(N, R),
        in_specs=[
            pl.BlockSpec((1, Hs, Ws, G * G * Cpi), lambda n, r: (n, 0, 0, 0)),
            pl.BlockSpec((9, Cpi, Cpo), lambda n, r: (0, 0, 0)),
            pl.BlockSpec((1, Cpi), lambda n, r: (0, 0)),
            pl.BlockSpec((1, Cpi), lambda n, r: (0, 0)),
            pl.BlockSpec((1, Cpo), lambda n, r: (0, 0)),
            pl.BlockSpec((1, Cpo), lambda n, r: (0, 0)),
        ],
        out_specs=pl.BlockSpec((1, TR, Wo, Cpo), lambda n, r: (n, r, 0, 0)),
        scratch_shapes=[pltpu.VMEM((G * G, Hs, Ws, Cpi), jnp.bfloat16)],
        compiler_params=cparams,
        cost_estimate=pl.CostEstimate(
            flops=2 * N * Ho * Wo * 9 * Cpi * Cpo, transcendentals=0,
            bytes_accessed=x_s2d.size * 4 + w1m.size * 2 + N * Ho * Wo * Cpo * 2),
    )(x_s2d, w1m, s1p, b1p, s2p, b2p)

    # ---- kernel 2: conv2(h) + shortcut ---- #
    h_pad = jnp.pad(h, ((0, 0), (1, 1), (1, 1), (0, 0)))
    w2m = _conv_weight(params["w2"], Cpo, Cpo)
    flops2 = 2 * N * Ho * Wo * 9 * Cpo * Cpo

    if equal:
        kernel2 = functools.partial(_conv2_add_id_kernel, TR=TR, Wo=Wo, Cpo=Cpo)
        out = pl.pallas_call(
            kernel2,
            out_shape=jax.ShapeDtypeStruct((N, Ho, Wo, Cpo), jnp.float32),
            grid=(N, R),
            in_specs=[
                pl.BlockSpec((1, Ho + 2, Wo + 2, Cpo), lambda n, r: (n, 0, 0, 0)),
                pl.BlockSpec((9, Cpo, Cpo), lambda n, r: (0, 0, 0)),
                pl.BlockSpec((1, TR, Wo, Cpo), lambda n, r: (n, r, 0, 0)),
            ],
            out_specs=pl.BlockSpec((1, TR, Wo, Cpo), lambda n, r: (n, r, 0, 0)),
            compiler_params=cparams,
            cost_estimate=pl.CostEstimate(
                flops=flops2, transcendentals=0,
                bytes_accessed=h_pad.size * 2 + w2m.size * 2 + 2 * N * Ho * Wo * Cpo * 4),
        )(h_pad, w2m, x)
    else:
        wscm = _conv_weight(params["wsc"], Cpi, Cpo).reshape(Cpi, Cpo)
        kernel2 = functools.partial(_conv2_add_proj_kernel, G=G,
                                    TR=TR, Wo=Wo, Cpi=Cpi, Cpo=Cpo)
        out = pl.pallas_call(
            kernel2,
            out_shape=jax.ShapeDtypeStruct((N, Ho, Wo, Cpo), jnp.float32),
            grid=(N, R),
            in_specs=[
                pl.BlockSpec((1, Ho + 2, Wo + 2, Cpo), lambda n, r: (n, 0, 0, 0)),
                pl.BlockSpec((9, Cpo, Cpo), lambda n, r: (0, 0, 0)),
                pl.BlockSpec((1, Hs, Ws, G * G * Cpi), lambda n, r: (n, 0, 0, 0)),
                pl.BlockSpec((1, Cpi), lambda n, r: (0, 0)),
                pl.BlockSpec((1, Cpi), lambda n, r: (0, 0)),
                pl.BlockSpec((Cpi, Cpo), lambda n, r: (0, 0)),
            ],
            out_specs=pl.BlockSpec((1, TR, Wo, Cpo), lambda n, r: (n, r, 0, 0)),
            compiler_params=cparams,
            cost_estimate=pl.CostEstimate(
                flops=flops2 + 2 * N * Ho * Wo * Cpi * Cpo, transcendentals=0,
                bytes_accessed=h_pad.size * 2 + x_s2d.size * 4
                + (w2m.size + wscm.size) * 2 + N * Ho * Wo * Cpo * 4),
        )(h_pad, w2m, x_s2d, s1p, b1p, wscm)

    out = out[..., :out_planes]
    return jnp.transpose(out, (0, 3, 1, 2))                              # back to NCHW


# ----------------- reference (mirrors the kernel's bf16 rounding) ----------- #

def _bf16(v):
    return v.astype(jnp.bfloat16).astype(jnp.float32)


def wrn_block_reference(x, params, in_planes, out_planes, stride):
    s1, b1 = _fold_bn(params["bn1_gamma"], params["bn1_beta"],
                      params["bn1_mean"], params["bn1_var"])
    s2, b2 = _fold_bn(params["bn2_gamma"], params["bn2_beta"],
                      params["bn2_mean"], params["bn2_var"])

    def conv(y, w, s, p):
        return lax.conv_general_dilated(
            y, _bf16(w), (s, s), [(p, p), (p, p)],
            dimension_numbers=("NCHW", "OIHW", "NCHW"))

    equal = in_planes == out_planes
    a = _bf16(jnp.maximum(x * s1[None, :, None, None] + b1[None, :, None, None], 0.0))
    h = jnp.maximum(conv(a, params["w1"], stride, 1) * s2[None, :, None, None]
                    + b2[None, :, None, None], 0.0)
    h = _bf16(h)
    out = conv(h, params["w2"], 1, 1)
    short = x if equal else conv(a, params["wsc"], stride, 0)
    return out + short


# ----------------------------------- main ----------------------------------- #

if __name__ == "__main__":
    key = jax.random.PRNGKey(0)
    kx1, kx2, kp1, kp2 = jax.random.split(key, 4)

    # Config 1: in_planes != out_planes, stride 2 (projection shortcut path).
    N, Cin, H, W = 2, 4, 16, 16
    Cout, stride = 8, 2
    params = init_wrn_block_params(kp1, Cin, Cout)
    x = jax.random.normal(kx1, (N, Cin, H, W), jnp.float32)
    out = jax.block_until_ready(wrn_block_forward(x, params, Cin, Cout, stride))
    ref = wrn_block_reference(x, params, Cin, Cout, stride)
    assert out.shape == (N, Cout, H // stride, W // stride)
    err = float(jnp.max(jnp.abs(out - ref)))
    assert jnp.allclose(out, ref, atol=5e-3, rtol=5e-3), err

    # Config 2: in_planes == out_planes, stride 1 (identity shortcut path).
    params2 = init_wrn_block_params(kp2, 8, 8)
    x2 = jax.random.normal(kx2, (N, 8, H, W), jnp.float32)
    out2 = jax.block_until_ready(wrn_block_forward(x2, params2, 8, 8, 1))
    ref2 = wrn_block_reference(x2, params2, 8, 8, 1)
    assert out2.shape == (N, 8, H, W)
    err2 = float(jnp.max(jnp.abs(out2 - ref2)))
    assert jnp.allclose(out2, ref2, atol=5e-3, rtol=5e-3), err2

    print("KERNEL_OK")
</pallas_src>

<mosaic_0001>
module attributes {stable_mosaic.version = 11 : i64} {
  func.func @_conv1_bn_relu_kernel(%arg0: i32, %arg1: i32, %arg2: memref<1x9x9x512xf32, #tpu.memory_space<vmem>>, %arg3: memref<9x128x128xbf16, #tpu.memory_space<vmem>>, %arg4: memref<1x128xf32, #tpu.memory_space<vmem>>, %arg5: memref<1x128xf32, #tpu.memory_space<vmem>>, %arg6: memref<1x128xf32, #tpu.memory_space<vmem>>, %arg7: memref<1x128xf32, #tpu.memory_space<vmem>>, %arg8: memref<1x8x8x128xbf16, #tpu.memory_space<vmem>>, %arg9: memref<4x9x9x128xbf16, #tpu.memory_space<vmem>>) attributes {dimension_semantics = [#tpu.dimension_semantics<parallel>, #tpu.dimension_semantics<arbitrary>], iteration_bounds = array<i64: 2, 1>, scalar_prefetch = 0 : i64, scratch_operands = 1 : i64, tpu.core_type = #tpu.core_type<tc>, window_params = [{transform_indices = @transform_0, window_bounds = array<i64: 1, 9, 9, 512>}, {pipeline_mode = #tpu.pipeline_mode<synchronous>, transform_indices = @transform_1, window_bounds = array<i64: 9, 128, 128>}, {pipeline_mode = #tpu.pipeline_mode<synchronous>, transform_indices = @transform_2, window_bounds = array<i64: 1, 128>}, {pipeline_mode = #tpu.pipeline_mode<synchronous>, transform_indices = @transform_3, window_bounds = array<i64: 1, 128>}, {pipeline_mode = #tpu.pipeline_mode<synchronous>, transform_indices = @transform_4, window_bounds = array<i64: 1, 128>}, {pipeline_mode = #tpu.pipeline_mode<synchronous>, transform_indices = @transform_5, window_bounds = array<i64: 1, 128>}, {transform_indices = @transform_6, window_bounds = array<i64: 1, 8, 8, 128>}]} {
    %c0 = arith.constant 0 : index
    %c0_0 = arith.constant 0 : index
    %0 = vector.load %arg4[%c0, %c0_0] : memref<1x128xf32, #tpu.memory_space<vmem>>, vector<1x128xf32>
    %c0_1 = arith.constant 0 : index
    %c0_2 = arith.constant 0 : index
    %1 = vector.load %arg5[%c0_1, %c0_2] : memref<1x128xf32, #tpu.memory_space<vmem>>, vector<1x128xf32>
    %c0_3 = arith.constant 0 : index
    %c0_4 = arith.constant 0 : index
    %c0_5 = arith.constant 0 : index
    %c0_6 = arith.constant 0 : index
    %2 = vector.load %arg2[%c0_3, %c0_4, %c0_5, %c0_6] : memref<1x9x9x512xf32, #tpu.memory_space<vmem>>, vector<1x9x9x128xf32>
    %3 = vector.shape_cast %2 : vector<1x9x9x128xf32> to vector<9x9x128xf32>
    %4 = vector.shape_cast %0 : vector<1x128xf32> to vector<1x1x128xf32>
    %5 = vector.broadcast %4 : vector<1x1x128xf32> to vector<9x9x128xf32>
    %6 = arith.mulf %3, %5 : vector<9x9x128xf32>
    %7 = vector.shape_cast %1 : vector<1x128xf32> to vector<1x1x128xf32>
    %8 = vector.broadcast %7 : vector<1x1x128xf32> to vector<9x9x128xf32>
    %9 = arith.addf %6, %8 : vector<9x9x128xf32>
    %cst = arith.constant 0.000000e+00 : f32
    %10 = vector.broadcast %cst : f32 to vector<9x9x128xf32>
    %11 = arith.maximumf %9, %10 : vector<9x9x128xf32>
    %12 = tpu.iota {dimensions = array<i32: 0>} : vector<9x9x128xi32>
    %c2_i32 = arith.constant 2 : i32
    %13 = vector.broadcast %c2_i32 : i32 to vector<9x9x128xi32>
    %14 = arith.muli %12, %13 : vector<9x9x128xi32>
    %c0_i32 = arith.constant 0 : i32
    %15 = vector.broadcast %c0_i32 : i32 to vector<9x9x128xi32>
    %16 = arith.addi %14, %15 : vector<9x9x128xi32>
    %17 = tpu.iota {dimensions = array<i32: 1>} : vector<9x9x128xi32>
    %c2_i32_7 = arith.constant 2 : i32
    %18 = vector.broadcast %c2_i32_7 : i32 to vector<9x9x128xi32>
    %19 = arith.muli %17, %18 : vector<9x9x128xi32>
    %c0_i32_8 = arith.constant 0 : i32
    %20 = vector.broadcast %c0_i32_8 : i32 to vector<9x9x128xi32>
    %21 = arith.addi %19, %20 : vector<9x9x128xi32>
    %c1_i32 = arith.constant 1 : i32
    %22 = vector.broadcast %c1_i32 : i32 to vector<9x9x128xi32>
    %23 = arith.cmpi sge, %16, %22 : vector<9x9x128xi32>
    %c16_i32 = arith.constant 16 : i32
    %24 = vector.broadcast %c16_i32 : i32 to vector<9x9x128xi32>
    %25 = arith.cmpi sle, %16, %24 : vector<9x9x128xi32>
    %26 = arith.andi %23, %25 : vector<9x9x128xi1>
    %c1_i32_9 = arith.constant 1 : i32
    %27 = vector.broadcast %c1_i32_9 : i32 to vector<9x9x128xi32>
    %28 = arith.cmpi sge, %21, %27 : vector<9x9x128xi32>
    %29 = arith.andi %26, %28 : vector<9x9x128xi1>
    %c16_i32_10 = arith.constant 16 : i32
    %30 = vector.broadcast %c16_i32_10 : i32 to vector<9x9x128xi32>
    %31 = arith.cmpi sle, %21, %30 : vector<9x9x128xi32>
    %32 = arith.andi %29, %31 : vector<9x9x128xi1>
    %cst_11 = arith.constant 0.000000e+00 : f32
    %33 = vector.broadcast %cst_11 : f32 to vector<9x9x128xf32>
    %34 = arith.select %32, %11, %33 : vector<9x9x128xi1>, vector<9x9x128xf32>
    %35 = arith.truncf %34 : vector<9x9x128xf32> to vector<9x9x128xbf16>
    %c0_12 = arith.constant 0 : index
    %c0_13 = arith.constant 0 : index
    %c0_14 = arith.constant 0 : index
    %c0_15 = arith.constant 0 : index
    %36 = vector.load %arg9[%c0_12, %c0_13, %c0_14, %c0_15] : memref<4x9x9x128xbf16, #tpu.memory_space<vmem>>, vector<1x9x9x128xbf16>
    %37 = vector.shape_cast %36 : vector<1x9x9x128xbf16> to vector<9x9x128xbf16>
    %38 = vector.shape_cast %35 : vector<9x9x128xbf16> to vector<1x9x9x128xbf16>
    tpu.vector_store %arg9[%c0_12, %c0_13, %c0_14, %c0_15], %38 {strides = array<i32>} : memref<4x9x9x128xbf16, #tpu.memory_space<vmem>>, vector<1x9x9x128xbf16>,
    %c0_16 = arith.constant 0 : index
    %c0_17 = arith.constant 0 : index
    %c0_18 = arith.constant 0 : index
    %c128 = arith.constant 128 : index
    %39 = vector.load %arg2[%c0_16, %c0_17, %c0_18, %c128] : memref<1x9x9x512xf32, #tpu.memory_space<vmem>>, vector<1x9x9x128xf32>
    %40 = vector.shape_cast %39 : vector<1x9x9x128xf32> to vector<9x9x128xf32>
    %41 = vector.shape_cast %0 : vector<1x128xf32> to vector<1x1x128xf32>
    %42 = vector.broadcast %41 : vector<1x1x128xf32> to vector<9x9x128xf32>
    %43 = arith.mulf %40, %42 : vector<9x9x128xf32>
    %44 = vector.shape_cast %1 : vector<1x128xf32> to vector<1x1x128xf32>
    %45 = vector.broadcast %44 : vector<1x1x128xf32> to vector<9x9x128xf32>
    %46 = arith.addf %43, %45 : vector<9x9x128xf32>
    %cst_19 = arith.constant 0.000000e+00 : f32
    %47 = vector.broadcast %cst_19 : f32 to vector<9x9x128xf32>
    %48 = arith.maximumf %46, %47 : vector<9x9x128xf32>
    %49 = tpu.iota {dimensions = array<i32: 0>} : vector<9x9x128xi32>
    %c2_i32_20 = arith.constant 2 : i32
    %50 = vector.broadcast %c2_i32_20 : i32 to vector<9x9x128xi32>
    %51 = arith.muli %49, %50 : vector<9x9x128xi32>
    %c0_i32_21 = arith.constant 0 : i32
    %52 = vector.broadcast %c0_i32_21 : i32 to vector<9x9x128xi32>
    %53 = arith.addi %51, %52 : vector<9x9x128xi32>
    %54 = tpu.iota {dimensions = array<i32: 1>} : vector<9x9x128xi32>
    %c2_i32_22 = arith.constant 2 : i32
    %55 = vector.broadcast %c2_i32_22 : i32 to vector<9x9x128xi32>
    %56 = arith.muli %54, %55 : vector<9x9x128xi32>
    %c1_i32_23 = arith.constant 1 : i32
    %57 = vector.broadcast %c1_i32_23 : i32 to vector<9x9x128xi32>
    %58 = arith.addi %56, %57 : vector<9x9x128xi32>
    %c1_i32_24 = arith.constant 1 : i32
    %59 = vector.broadcast %c1_i32_24 : i32 to vector<9x9x128xi32>
    %60 = arith.cmpi sge, %53, %59 : vector<9x9x128xi32>
    %c16_i32_25 = arith.constant 16 : i32
    %61 = vector.broadcast %c16_i32_25 : i32 to vector<9x9x128xi32>
    %62 = arith.cmpi sle, %53, %61 : vector<9x9x128xi32>
    %63 = arith.andi %60, %62 : vector<9x9x128xi1>
    %c1_i32_26 = arith.constant 1 : i32
    %64 = vector.broadcast %c1_i32_26 : i32 to vector<9x9x128xi32>
    %65 = arith.cmpi sge, %58, %64 : vector<9x9x128xi32>
    %66 = arith.andi %63, %65 : vector<9x9x128xi1>
    %c16_i32_27 = arith.constant 16 : i32
    %67 = vector.broadcast %c16_i32_27 : i32 to vector<9x9x128xi32>
    %68 = arith.cmpi sle, %58, %67 : vector<9x9x128xi32>
    %69 = arith.andi %66, %68 : vector<9x9x128xi1>
    %cst_28 = arith.constant 0.000000e+00 : f32
    %70 = vector.broadcast %cst_28 : f32 to vector<9x9x128xf32>
    %71 = arith.select %69, %48, %70 : vector<9x9x128xi1>, vector<9x9x128xf32>
    %72 = arith.truncf %71 : vector<9x9x128xf32> to vector<9x9x128xbf16>
    %c1 = arith.constant 1 : index
    %c0_29 = arith.constant 0 : index
    %c0_30 = arith.constant 0 : index
    %c0_31 = arith.constant 0 : index
    %73 = vector.load %arg9[%c1, %c0_29, %c0_30, %c0_31] : memref<4x9x9x128xbf16, #tpu.memory_space<vmem>>, vector<1x9x9x128xbf16>
    %74 = vector.shape_cast %73 : vector<1x9x9x128xbf16> to vector<9x9x128xbf16>
    %75 = vector.shape_cast %72 : vector<9x9x128xbf16> to vector<1x9x9x128xbf16>
    tpu.vector_store %arg9[%c1, %c0_29, %c0_30, %c0_31], %75 {strides = array<i32>} : memref<4x9x9x128xbf16, #tpu.memory_space<vmem>>, vector<1x9x9x128xbf16>,
    %c0_32 = arith.constant 0 : index
    %c0_33 = arith.constant 0 : index
    %c0_34 = arith.constant 0 : index
    %c256 = arith.constant 256 : index
    %76 = vector.load %arg2[%c0_32, %c0_33, %c0_34, %c256] : memref<1x9x9x512xf32, #tpu.memory_space<vmem>>, vector<1x9x9x128xf32>
    %77 = vector.shape_cast %76 : vector<1x9x9x128xf32> to vector<9x9x128xf32>
    %78 = vector.shape_cast %0 : vector<1x128xf32> to vector<1x1x128xf32>
    %79 = vector.broadcast %78 : vector<1x1x128xf32> to vector<9x9x128xf32>
    %80 = arith.mulf %77, %79 : vector<9x9x128xf32>
    %81 = vector.shape_cast %1 : vector<1x128xf32> to vector<1x1x128xf32>
    %82 = vector.broadcast %81 : vector<1x1x128xf32> to vector<9x9x128xf32>
    %83 = arith.addf %80, %82 : vector<9x9x128xf32>
    %cst_35 = arith.constant 0.000000e+00 : f32
    %84 = vector.broadcast %cst_35 : f32 to vector<9x9x128xf32>
    %85 = arith.maximumf %83, %84 : vector<9x9x128xf32>
    %86 = tpu.iota {dimensions = array<i32: 0>} : vector<9x9x128xi32>
    %c2_i32_36 = arith.constant 2 : i32
    %87 = vector.broadcast %c2_i32_36 : i32 to vector<9x9x128xi32>
    %88 = arith.muli %86, %87 : vector<9x9x128xi32>
    %c1_i32_37 = arith.constant 1 : i32
    %89 = vector.broadcast %c1_i32_37 : i32 to vector<9x9x128xi32>
    %90 = arith.addi %88, %89 : vector<9x9x128xi32>
    %91 = tpu.iota {dimensions = array<i32: 1>} : vector<9x9x128xi32>
    %c2_i32_38 = arith.constant 2 : i32
    %92 = vector.broadcast %c2_i32_38 : i32 to vector<9x9x128xi32>
    %93 = arith.muli %91, %92 : vector<9x9x128xi32>
    %c0_i32_39 = arith.constant 0 : i32
    %94 = vector.broadcast %c0_i32_39 : i32 to vector<9x9x128xi32>
    %95 = arith.addi %93, %94 : vector<9x9x128xi32>
    %c1_i32_40 = arith.constant 1 : i32
    %96 = vector.broadcast %c1_i32_40 : i32 to vector<9x9x128xi32>
    %97 = arith.cmpi sge, %90, %96 : vector<9x9x128xi32>
    %c16_i32_41 = arith.constant 16 : i32
    %98 = vector.broadcast %c16_i32_41 : i32 to vector<9x9x128xi32>
    %99 = arith.cmpi sle, %90, %98 : vector<9x9x128xi32>
    %100 = arith.andi %97, %99 : vector<9x9x128xi1>
    %c1_i32_42 = arith.constant 1 : i32
    %101 = vector.broadcast %c1_i32_42 : i32 to vector<9x9x128xi32>
    %102 = arith.cmpi sge, %95, %101 : vector<9x9x128xi32>
    %103 = arith.andi %100, %102 : vector<9x9x128xi1>
    %c16_i32_43 = arith.constant 16 : i32
    %104 = vector.broadcast %c16_i32_43 : i32 to vector<9x9x128xi32>
    %105 = arith.cmpi sle, %95, %104 : vector<9x9x128xi32>
    %106 = arith.andi %103, %105 : vector<9x9x128xi1>
    %cst_44 = arith.constant 0.000000e+00 : f32
    %107 = vector.broadcast %cst_44 : f32 to vector<9x9x128xf32>
    %108 = arith.select %106, %85, %107 : vector<9x9x128xi1>, vector<9x9x128xf32>
    %109 = arith.truncf %108 : vector<9x9x128xf32> to vector<9x9x128xbf16>
    %c2 = arith.constant 2 : index
    %c0_45 = arith.constant 0 : index
    %c0_46 = arith.constant 0 : index
    %c0_47 = arith.constant 0 : index
    %110 = vector.load %arg9[%c2, %c0_45, %c0_46, %c0_47] : memref<4x9x9x128xbf16, #tpu.memory_space<vmem>>, vector<1x9x9x128xbf16>
    %111 = vector.shape_cast %110 : vector<1x9x9x128xbf16> to vector<9x9x128xbf16>
    %112 = vector.shape_cast %109 : vector<9x9x128xbf16> to vector<1x9x9x128xbf16>
    tpu.vector_store %arg9[%c2, %c0_45, %c0_46, %c0_47], %112 {strides = array<i32>} : memref<4x9x9x128xbf16, #tpu.memory_space<vmem>>, vector<1x9x9x128xbf16>,
    %c0_48 = arith.constant 0 : index
    %c0_49 = arith.constant 0 : index
    %c0_50 = arith.constant 0 : index
    %c384 = arith.constant 384 : index
    %113 = vector.load %arg2[%c0_48, %c0_49, %c0_50, %c384] : memref<1x9x9x512xf32, #tpu.memory_space<vmem>>, vector<1x9x9x128xf32>
    %114 = vector.shape_cast %113 : vector<1x9x9x128xf32> to vector<9x9x128xf32>
    %115 = vector.shape_cast %0 : vector<1x128xf32> to vector<1x1x128xf32>
    %116 = vector.broadcast %115 : vector<1x1x128xf32> to vector<9x9x128xf32>
    %117 = arith.mulf %114, %116 : vector<9x9x128xf32>
    %118 = vector.shape_cast %1 : vector<1x128xf32> to vector<1x1x128xf32>
    %119 = vector.broadcast %118 : vector<1x1x128xf32> to vector<9x9x128xf32>
    %120 = arith.addf %117, %119 : vector<9x9x128xf32>
    %cst_51 = arith.constant 0.000000e+00 : f32
    %121 = vector.broadcast %cst_51 : f32 to vector<9x9x128xf32>
    %122 = arith.maximumf %120, %121 : vector<9x9x128xf32>
    %123 = tpu.iota {dimensions = array<i32: 0>} : vector<9x9x128xi32>
    %c2_i32_52 = arith.constant 2 : i32
    %124 = vector.broadcast %c2_i32_52 : i32 to vector<9x9x128xi32>
    %125 = arith.muli %123, %124 : vector<9x9x128xi32>
    %c1_i32_53 = arith.constant 1 : i32
    %126 = vector.broadcast %c1_i32_53 : i32 to vector<9x9x128xi32>
    %127 = arith.addi %125, %126 : vector<9x9x128xi32>
    %128 = tpu.iota {dimensions = array<i32: 1>} : vector<9x9x128xi32>
    %c2_i32_54 = arith.constant 2 : i32
    %129 = vector.broadcast %c2_i32_54 : i32 to vector<9x9x128xi32>
    %130 = arith.muli %128, %129 : vector<9x9x128xi32>
    %c1_i32_55 = arith.constant 1 : i32
    %131 = vector.broadcast %c1_i32_55 : i32 to vector<9x9x128xi32>
    %132 = arith.addi %130, %131 : vector<9x9x128xi32>
    %c1_i32_56 = arith.constant 1 : i32
    %133 = vector.broadcast %c1_i32_56 : i32 to vector<9x9x128xi32>
    %134 = arith.cmpi sge, %127, %133 : vector<9x9x128xi32>
    %c16_i32_57 = arith.constant 16 : i32
    %135 = vector.broadcast %c16_i32_57 : i32 to vector<9x9x128xi32>
    %136 = arith.cmpi sle, %127, %135 : vector<9x9x128xi32>
    %137 = arith.andi %134, %136 : vector<9x9x128xi1>
    %c1_i32_58 = arith.constant 1 : i32
    %138 = vector.broadcast %c1_i32_58 : i32 to vector<9x9x128xi32>
    %139 = arith.cmpi sge, %132, %138 : vector<9x9x128xi32>
    %140 = arith.andi %137, %139 : vector<9x9x128xi1>
    %c16_i32_59 = arith.constant 16 : i32
    %141 = vector.broadcast %c16_i32_59 : i32 to vector<9x9x128xi32>
    %142 = arith.cmpi sle, %132, %141 : vector<9x9x128xi32>
    %143 = arith.andi %140, %142 : vector<9x9x128xi1>
    %cst_60 = arith.constant 0.000000e+00 : f32
    %144 = vector.broadcast %cst_60 : f32 to vector<9x9x128xf32>
    %145 = arith.select %143, %122, %144 : vector<9x9x128xi1>, vector<9x9x128xf32>
    %146 = arith.truncf %145 : vector<9x9x128xf32> to vector<9x9x128xbf16>
    %c3 = arith.constant 3 : index
    %c0_61 = arith.constant 0 : index
    %c0_62 = arith.constant 0 : index
    %c0_63 = arith.constant 0 : index
    %147 = vector.load %arg9[%c3, %c0_61, %c0_62, %c0_63] : memref<4x9x9x128xbf16, #tpu.memory_space<vmem>>, vector<1x9x9x128xbf16>
    %148 = vector.shape_cast %147 : vector<1x9x9x128xbf16> to vector<9x9x128xbf16>
    %149 = vector.shape_cast %146 : vector<9x9x128xbf16> to vector<1x9x9x128xbf16>
    tpu.vector_store %arg9[%c3, %c0_61, %c0_62, %c0_63], %149 {strides = array<i32>} : memref<4x9x9x128xbf16, #tpu.memory_space<vmem>>, vector<1x9x9x128xbf16>,
    %c8_i32 = arith.constant 8 : i32
    %150 = arith.muli %arg1, %c8_i32 : i32
    %cst_64 = arith.constant 0.000000e+00 : f32
    %151 = vector.broadcast %cst_64 : f32 to vector<64x128xf32>
    %c0_i32_65 = arith.constant 0 : i32
    %152 = arith.addi %150, %c0_i32_65 : i32
    %c0_66 = arith.constant 0 : index
    %153 = arith.index_cast %152 : i32 to index
    %c0_67 = arith.constant 0 : index
    %c0_68 = arith.constant 0 : index
    %154 = vector.load %arg9[%c0_66, %153, %c0_67, %c0_68] : memref<4x9x9x128xbf16, #tpu.memory_space<vmem>>, vector<1x8x8x128xbf16>
    %155 = vector.shape_cast %154 : vector<1x8x8x128xbf16> to vector<8x8x128xbf16>
    %156 = vector.shape_cast %155 : vector<8x8x128xbf16> to vector<64x128xbf16>
    %c0_69 = arith.constant 0 : index
    %c0_70 = arith.constant 0 : index
    %c0_71 = arith.constant 0 : index
    %157 = vector.load %arg3[%c0_69, %c0_70, %c0_71] : memref<9x128x128xbf16, #tpu.memory_space<vmem>>, vector<1x128x128xbf16>
    %158 = vector.shape_cast %157 : vector<1x128x128xbf16> to vector<128x128xbf16>
    %cst_72 = arith.constant dense<0.000000e+00> : vector<64x128xf32>
    %159 = tpu.matmul %156, %158, %cst_72 {dimension_numbers = #tpu.dot_dimension_numbers<[1], [0], [0], [1], [0, 0, 1, 1], [], []>} : vector<64x128xbf16>, vector<128x128xbf16>, vector<64x128xf32> -> vector<64x128xf32>
    %160 = arith.addf %151, %159 : vector<64x128xf32>
    %c0_i32_73 = arith.constant 0 : i32
    %161 = arith.addi %150, %c0_i32_73 : i32
    %c1_74 = arith.constant 1 : index
    %162 = arith.index_cast %161 : i32 to index
    %c0_75 = arith.constant 0 : index
    %c0_76 = arith.constant 0 : index
    %163 = vector.load %arg9[%c1_74, %162, %c0_75, %c0_76] : memref<4x9x9x128xbf16, #tpu.memory_space<vmem>>, vector<1x8x8x128xbf16>
    %164 = vector.shape_cast %163 : vector<1x8x8x128xbf16> to vector<8x8x128xbf16>
    %165 = vector.shape_cast %164 : vector<8x8x128xbf16> to vector<64x128xbf16>
    %c1_77 = arith.constant 1 : index
    %c0_78 = arith.constant 0 : index
    %c0_79 = arith.constant 0 : index
    %166 = vector.load %arg3[%c1_77, %c0_78, %c0_79] : memref<9x128x128xbf16, #tpu.memory_space<vmem>>, vector<1x128x128xbf16>
    %167 = vector.shape_cast %166 : vector<1x128x128xbf16> to vector<128x128xbf16>
    %cst_80 = arith.constant dense<0.000000e+00> : vector<64x128xf32>
    %168 = tpu.matmul %165, %167, %cst_80 {dimension_numbers = #tpu.dot_dimension_numbers<[1], [0], [0], [1], [0, 0, 1, 1], [], []>} : vector<64x128xbf16>, vector<128x128xbf16>, vector<64x128xf32> -> vector<64x128xf32>
    %169 = arith.addf %160, %168 : vector<64x128xf32>
    %c0_i32_81 = arith.constant 0 : i32
    %170 = arith.addi %150, %c0_i32_81 : i32
    %c0_82 = arith.constant 0 : index
    %171 = arith.index_cast %170 : i32 to index
    %c1_83 = arith.constant 1 : index
    %c0_84 = arith.constant 0 : index
    %172 = vector.load %arg9[%c0_82, %171, %c1_83, %c0_84] : memref<4x9x9x128xbf16, #tpu.memory_space<vmem>>, vector<1x8x8x128xbf16>
    %173 = vector.shape_cast %172 : vector<1x8x8x128xbf16> to vector<8x8x128xbf16>
    %174 = vector.shape_cast %173 : vector<8x8x128xbf16> to vector<64x128xbf16>
    %c2_85 = arith.constant 2 : index
    %c0_86 = arith.constant 0 : index
    %c0_87 = arith.constant 0 : index
    %175 = vector.load %arg3[%c2_85, %c0_86, %c0_87] : memref<9x128x128xbf16, #tpu.memory_space<vmem>>, vector<1x128x128xbf16>
    %176 = vector.shape_cast %175 : vector<1x128x128xbf16> to vector<128x128xbf16>
    %cst_88 = arith.constant dense<0.000000e+00> : vector<64x128xf32>
    %177 = tpu.matmul %174, %176, %cst_88 {dimension_numbers = #tpu.dot_dimension_numbers<[1], [0], [0], [1], [0, 0, 1, 1], [], []>} : vector<64x128xbf16>, vector<128x128xbf16>, vector<64x128xf32> -> vector<64x128xf32>
    %178 = arith.addf %169, %177 : vector<64x128xf32>
    %c0_i32_89 = arith.constant 0 : i32
    %179 = arith.addi %150, %c0_i32_89 : i32
    %c2_90 = arith.constant 2 : index
    %180 = arith.index_cast %179 : i32 to index
    %c0_91 = arith.constant 0 : index
    %c0_92 = arith.constant 0 : index
    %181 = vector.load %arg9[%c2_90, %180, %c0_91, %c0_92] : memref<4x9x9x128xbf16, #tpu.memory_space<vmem>>, vector<1x8x8x128xbf16>
    %182 = vector.shape_cast %181 : vector<1x8x8x128xbf16> to vector<8x8x128xbf16>
    %183 = vector.shape_cast %182 : vector<8x8x128xbf16> to vector<64x128xbf16>
    %c3_93 = arith.constant 3 : index
    %c0_94 = arith.constant 0 : index
    %c0_95 = arith.constant 0 : index
    %184 = vector.load %arg3[%c3_93, %c0_94, %c0_95] : memref<9x128x128xbf16, #tpu.memory_space<vmem>>, vector<1x128x128xbf16>
    %185 = vector.shape_cast %184 : vector<1x128x128xbf16> to vector<128x128xbf16>
    %cst_96 = arith.constant dense<0.000000e+00> : vector<64x128xf32>
    %186 = tpu.matmul %183, %185, %cst_96 {dimension_numbers = #tpu.dot_dimension_numbers<[1], [0], [0], [1], [0, 0, 1, 1], [], []>} : vector<64x128xbf16>, vector<128x128xbf16>, vector<64x128xf32> -> vector<64x128xf32>
    %187 = arith.addf %178, %186 : vector<64x128xf32>
    %c0_i32_97 = arith.constant 0 : i32
    %188 = arith.addi %150, %c0_i32_97 : i32
    %c3_98 = arith.constant 3 : index
    %189 = arith.index_cast %188 : i32 to index
    %c0_99 = arith.constant 0 : index
    %c0_100 = arith.constant 0 : index
    %190 = vector.load %arg9[%c3_98, %189, %c0_99, %c0_100] : memref<4x9x9x128xbf16, #tpu.memory_space<vmem>>, vector<1x8x8x128xbf16>
    %191 = vector.shape_cast %190 : vector<1x8x8x128xbf16> to vector<8x8x128xbf16>
    %192 = vector.shape_cast %191 : vector<8x8x128xbf16> to vector<64x128xbf16>
    %c4 = arith.constant 4 : index
    %c0_101 = arith.constant 0 : index
    %c0_102 = arith.constant 0 : index
    %193 = vector.load %arg3[%c4, %c0_101, %c0_102] : memref<9x128x128xbf16, #tpu.memory_space<vmem>>, vector<1x128x128xbf16>
    %194 = vector.shape_cast %193 : vector<1x128x128xbf16> to vector<128x128xbf16>
    %cst_103 = arith.constant dense<0.000000e+00> : vector<64x128xf32>
    %195 = tpu.matmul %192, %194, %cst_103 {dimension_numbers = #tpu.dot_dimension_numbers<[1], [0], [0], [1], [0, 0, 1, 1], [], []>} : vector<64x128xbf16>, vector<128x128xbf16>, vector<64x128xf32> -> vector<64x128xf32>
    %196 = arith.addf %187, %195 : vector<64x128xf32>
    %c0_i32_104 = arith.constant 0 : i32
    %197 = arith.addi %150, %c0_i32_104 : i32
    %c2_105 = arith.constant 2 : index
    %198 = arith.index_cast %197 : i32 to index
    %c1_106 = arith.constant 1 : index
    %c0_107 = arith.constant 0 : index
    %199 = vector.load %arg9[%c2_105, %198, %c1_106, %c0_107] : memref<4x9x9x128xbf16, #tpu.memory_space<vmem>>, vector<1x8x8x128xbf16>
    %200 = vector.shape_cast %199 : vector<1x8x8x128xbf16> to vector<8x8x128xbf16>
    %201 = vector.shape_cast %200 : vector<8x8x128xbf16> to vector<64x128xbf16>
    %c5 = arith.constant 5 : index
    %c0_108 = arith.constant 0 : index
    %c0_109 = arith.constant 0 : index
    %202 = vector.load %arg3[%c5, %c0_108, %c0_109] : memref<9x128x128xbf16, #tpu.memory_space<vmem>>, vector<1x128x128xbf16>
    %203 = vector.shape_cast %202 : vector<1x128x128xbf16> to vector<128x128xbf16>
    %cst_110 = arith.constant dense<0.000000e+00> : vector<64x128xf32>
    %204 = tpu.matmul %201, %203, %cst_110 {dimension_numbers = #tpu.dot_dimension_numbers<[1], [0], [0], [1], [0, 0, 1, 1], [], []>} : vector<64x128xbf16>, vector<128x128xbf16>, vector<64x128xf32> -> vector<64x128xf32>
    %205 = arith.addf %196, %204 : vector<64x128xf32>
    %c1_i32_111 = arith.constant 1 : i32
    %206 = arith.addi %150, %c1_i32_111 : i32
    %c0_112 = arith.constant 0 : index
    %207 = arith.index_cast %206 : i32 to index
    %c0_113 = arith.constant 0 : index
    %c0_114 = arith.constant 0 : index
    %208 = vector.load %arg9[%c0_112, %207, %c0_113, %c0_114] : memref<4x9x9x128xbf16, #tpu.memory_space<vmem>>, vector<1x8x8x128xbf16>
    %209 = vector.shape_cast %208 : vector<1x8x8x128xbf16> to vector<8x8x128xbf16>
    %210 = vector.shape_cast %209 : vector<8x8x128xbf16> to vector<64x128xbf16>
    %c6 = arith.constant 6 : index
    %c0_115 = arith.constant 0 : index
    %c0_116 = arith.constant 0 : index
    %211 = vector.load %arg3[%c6, %c0_115, %c0_116] : memref<9x128x128xbf16, #tpu.memory_space<vmem>>, vector<1x128x128xbf16>
    %212 = vector.shape_cast %211 : vector<1x128x128xbf16> to vector<128x128xbf16>
    %cst_117 = arith.constant dense<0.000000e+00> : vector<64x128xf32>
    %213 = tpu.matmul %210, %212, %cst_117 {dimension_numbers = #tpu.dot_dimension_numbers<[1], [0], [0], [1], [0, 0, 1, 1], [], []>} : vector<64x128xbf16>, vector<128x128xbf16>, vector<64x128xf32> -> vector<64x128xf32>
    %214 = arith.addf %205, %213 : vector<64x128xf32>
    %c1_i32_118 = arith.constant 1 : i32
    %215 = arith.addi %150, %c1_i32_118 : i32
    %c1_119 = arith.constant 1 : index
    %216 = arith.index_cast %215 : i32 to index
    %c0_120 = arith.constant 0 : index
    %c0_121 = arith.constant 0 : index
    %217 = vector.load %arg9[%c1_119, %216, %c0_120, %c0_121] : memref<4x9x9x128xbf16, #tpu.memory_space<vmem>>, vector<1x8x8x128xbf16>
    %218 = vector.shape_cast %217 : vector<1x8x8x128xbf16> to vector<8x8x128xbf16>
    %219 = vector.shape_cast %218 : vector<8x8x128xbf16> to vector<64x128xbf16>
    %c7 = arith.constant 7 : index
    %c0_122 = arith.constant 0 : index
    %c0_123 = arith.constant 0 : index
    %220 = vector.load %arg3[%c7, %c0_122, %c0_123] : memref<9x128x128xbf16, #tpu.memory_space<vmem>>, vector<1x128x128xbf16>
    %221 = vector.shape_cast %220 : vector<1x128x128xbf16> to vector<128x128xbf16>
    %cst_124 = arith.constant dense<0.000000e+00> : vector<64x128xf32>
    %222 = tpu.matmul %219, %221, %cst_124 {dimension_numbers = #tpu.dot_dimension_numbers<[1], [0], [0], [1], [0, 0, 1, 1], [], []>} : vector<64x128xbf16>, vector<128x128xbf16>, vector<64x128xf32> -> vector<64x128xf32>
    %223 = arith.addf %214, %222 : vector<64x128xf32>
    %c1_i32_125 = arith.constant 1 : i32
    %224 = arith.addi %150, %c1_i32_125 : i32
    %c0_126 = arith.constant 0 : index
    %225 = arith.index_cast %224 : i32 to index
    %c1_127 = arith.constant 1 : index
    %c0_128 = arith.constant 0 : index
    %226 = vector.load %arg9[%c0_126, %225, %c1_127, %c0_128] : memref<4x9x9x128xbf16, #tpu.memory_space<vmem>>, vector<1x8x8x128xbf16>
    %227 = vector.shape_cast %226 : vector<1x8x8x128xbf16> to vector<8x8x128xbf16>
    %228 = vector.shape_cast %227 : vector<8x8x128xbf16> to vector<64x128xbf16>
    %c8 = arith.constant 8 : index
    %c0_129 = arith.constant 0 : index
    %c0_130 = arith.constant 0 : index
    %229 = vector.load %arg3[%c8, %c0_129, %c0_130] : memref<9x128x128xbf16, #tpu.memory_space<vmem>>, vector<1x128x128xbf16>
    %230 = vector.shape_cast %229 : vector<1x128x128xbf16> to vector<128x128xbf16>
    %cst_131 = arith.constant dense<0.000000e+00> : vector<64x128xf32>
    %231 = tpu.matmul %228, %230, %cst_131 {dimension_numbers = #tpu.dot_dimension_numbers<[1], [0], [0], [1], [0, 0, 1, 1], [], []>} : vector<64x128xbf16>, vector<128x128xbf16>, vector<64x128xf32> -> vector<64x128xf32>
    %232 = arith.addf %223, %231 : vector<64x128xf32>
    %c0_132 = arith.constant 0 : index
    %c0_133 = arith.constant 0 : index
    %233 = vector.load %arg6[%c0_132, %c0_133] : memref<1x128xf32, #tpu.memory_space<vmem>>, vector<1x128xf32>
    %234 = vector.broadcast %233 : vector<1x128xf32> to vector<64x128xf32>
    %235 = arith.mulf %232, %234 : vector<64x128xf32>
    %c0_134 = arith.constant 0 : index
    %c0_135 = arith.constant 0 : index
    %236 = vector.load %arg7[%c0_134, %c0_135] : memref<1x128xf32, #tpu.memory_space<vmem>>, vector<1x128xf32>
    %237 = vector.broadcast %236 : vector<1x128xf32> to vector<64x128xf32>
    %238 = arith.addf %235, %237 : vector<64x128xf32>
    %cst_136 = arith.constant 0.000000e+00 : f32
    %239 = vector.broadcast %cst_136 : f32 to vector<64x128xf32>
    %240 = arith.maximumf %238, %239 : vector<64x128xf32>
    %241 = vector.shape_cast %240 : vector<64x128xf32> to vector<8x8x128xf32>
    %242 = arith.truncf %241 : vector<8x8x128xf32> to vector<8x8x128xbf16>
    %c0_137 = arith.constant 0 : index
    %c0_138 = arith.constant 0 : index
    %c0_139 = arith.constant 0 : index
    %c0_140 = arith.constant 0 : index
    %243 = vector.load %arg8[%c0_137, %c0_138, %c0_139, %c0_140] : memref<1x8x8x128xbf16, #tpu.memory_space<vmem>>, vector<1x8x8x128xbf16>
    %244 = vector.shape_cast %243 : vector<1x8x8x128xbf16> to vector<8x8x128xbf16>
    %245 = vector.shape_cast %242 : vector<8x8x128xbf16> to vector<1x8x8x128xbf16>
    tpu.vector_store %arg8[%c0_137, %c0_138, %c0_139, %c0_140], %245 {strides = array<i32>} : memref<1x8x8x128xbf16, #tpu.memory_space<vmem>>, vector<1x8x8x128xbf16>,
    return
  }
  func.func @transform_0(%arg0: i32, %arg1: i32) -> (i32, i32, i32, i32) {
    %c0_i32 = arith.constant 0 : i32
    %c0_i32_0 = arith.constant 0 : i32
    %c0_i32_1 = arith.constant 0 : i32
    %c0_i32_2 = arith.constant 0 : i32
    return %arg0, %c0_i32, %c0_i32_0, %c0_i32_1 : i32, i32, i32, i32
  }
  func.func @transform_1(%arg0: i32, %arg1: i32) -> (i32, i32, i32) {
    %c0_i32 = arith.constant 0 : i32
    %c0_i32_0 = arith.constant 0 : i32
    %c0_i32_1 = arith.constant 0 : i32
    %c0_i32_2 = arith.constant 0 : i32
    return %c0_i32, %c0_i32_0, %c0_i32_1 : i32, i32, i32
  }
  func.func @transform_2(%arg0: i32, %arg1: i32) -> (i32, i32) {
    %c0_i32 = arith.constant 0 : i32
    %c0_i32_0 = arith.constant 0 : i32
    %c0_i32_1 = arith.constant 0 : i32
    return %c0_i32, %c0_i32_0 : i32, i32
  }
  func.func @transform_3(%arg0: i32, %arg1: i32) -> (i32, i32) {
    %c0_i32 = arith.constant 0 : i32
    %c0_i32_0 = arith.constant 0 : i32
    %c0_i32_1 = arith.constant 0 : i32
    return %c0_i32, %c0_i32_0 : i32, i32
  }
  func.func @transform_4(%arg0: i32, %arg1: i32) -> (i32, i32) {
    %c0_i32 = arith.constant 0 : i32
    %c0_i32_0 = arith.constant 0 : i32
    %c0_i32_1 = arith.constant 0 : i32
    return %c0_i32, %c0_i32_0 : i32, i32
  }
  func.func @transform_5(%arg0: i32, %arg1: i32) -> (i32, i32) {
    %c0_i32 = arith.constant 0 : i32
    %c0_i32_0 = arith.constant 0 : i32
    %c0_i32_1 = arith.constant 0 : i32
    return %c0_i32, %c0_i32_0 : i32, i32
  }
  func.func @transform_6(%arg0: i32, %arg1: i32) -> (i32, i32, i32, i32) {
    %c0_i32 = arith.constant 0 : i32
    %c0_i32_0 = arith.constant 0 : i32
    %c0_i32_1 = arith.constant 0 : i32
    return %arg0, %arg1, %c0_i32, %c0_i32_0 : i32, i32, i32, i32
  }
}

</mosaic_0001>

<llo_original>
// kernel: tpu_custom_call.1
$region0: #{tpu_custom_call.1}
  #allocation0 [shape = 'u32[]', space=smem, size = 0x4, offset = 0x4, fixed_abs, tag = 'smem constant byte address 0x4 - core index']
  #allocation1 [shape = 'u32[72,128]{1,0:T(1,128)}', space=vmem, size = 0x9000, scoped, tag = 'internal scratch']
  #allocation2 [shape = 'bf16[4,9,9,128]{3,2,1,0:T(8,128)(2,1)}', space=vmem, size = 0x24000, scoped, tag = 'scratch operand']
  %s0 = inlined_call_operand.vmem [shape: f32[2,9,9,512], index: 0, kind: input, shape index: {}]
  %s1 = inlined_call_operand.vmem [shape: bf16[9,128,128], index: 1, kind: input, shape index: {}]
  %s2 = inlined_call_operand.vmem [shape: f32[1,128], index: 2, kind: input, shape index: {}]
  %s3 = inlined_call_operand.vmem [shape: f32[1,128], index: 3, kind: input, shape index: {}]
  %s4 = inlined_call_operand.vmem [shape: f32[1,128], index: 4, kind: input, shape index: {}]
  %s5 = inlined_call_operand.vmem [shape: f32[1,128], index: 5, kind: input, shape index: {}]
  %s6 = inlined_call_operand.hbm [shape: bf16[2,8,8,128], index: 6, kind: output, shape index: {}]
  %s7 = sld [smem:[#allocation0]]
  $region57: #{tpu_custom_call.1} parent=0
    _
  %s9 = ssub.s32 1, %s7
  %s10 = scalar_select 0, %s9, %s7
  $region1: #{tpu_custom_call.1} parent=0
    #allocation3 [shape = 'u8[32768]{0}', space=vmem, size = 0x8000, scoped, tag = 'output window, operand 0']
    #allocation4 [shape = 's32[2]{0}', space=sflag, size = 0x8, scoped, tag = 'scoped memory for tpu_custom_call.1']
    %11 = vsyncpa [#allocation4], 0
    %s12 = scalar_lea.sflag [#allocation4], 1
    %13 = vsyncpa %s12, 0
    loop: start=0, step=1, limit=4
    $region2: #{tpu_custom_call.1} parent=1 // loop_pre_header
      _
    $region3: #{tpu_custom_call.1} parent=1 // loop_header
      %s15 = sphi 0, %s19
      %p16 = scmp.ge.s32.totalorder %s15, 4
      %s22 = sphi 0, %s34
      %s23 = sphi 0, %s30
      %s24 = sphi 0, %s22
      %s25 = sphi 0, %s23
      %s26 = sphi 0, %s24
      %s27 = sphi 0, %s25
      %s37 = sphi 0, %s39
      %s40 = sphi 0, %s37
      %s41 = sphi 0, %s40
      %s57 = sphi 0, %s41
      %s61 = sphi 0, %s61
      %s63 = sphi 0, %s61
      %s64 = sphi 0, %s63
      %s78 = sphi 0, %s64
      %s82 = sphi 0, %s82
      %s84 = sphi 0, %s82
      %s85 = sphi 0, %s84
      %s99 = sphi 0, %s85
      %s103 = sphi 0, %s103
      %s105 = sphi 0, %s103
      %s106 = sphi 0, %s105
      %s120 = sphi 0, %s106
      %s124 = sphi 0, %s124
      %s126 = sphi 0, %s124
      %s127 = sphi 0, %s126
      %s141 = sphi 0, %s127
      %s145 = sphi 0, %s145
      %s147 = sphi 0, %s145
      %s148 = sphi 0, %s147
      %s162 = sphi 0, %s148
      %s170 = sphi 0, %s172
      %s173 = sphi 0, %s170
      %s174 = sphi 0, %s173
      %s190 = sphi 0, %s174
    $region4: #{tpu_custom_call.1} parent=1 // loop_header_branch
      %18 = sbr.rel (%p16) target = $region8
    $region5: #{tpu_custom_call.1} parent=1 // loop_body
      %s20 = ssub.s32 %s15, 1
      %s21 = ssub.s32 %s15, 2
      %s28 = sadd.s32 1, %s23
      %p29 = scmp.ge.s32.totalorder %s28, 1
      %s30 = scalar_select %p29, 0, %s28
      %s31 = sadd.s32 1, %s22
      %s32 = scalar_select %p29, %s31, %s22
      %p33 = scmp.ge.s32.totalorder %s32, 2
      %s34 = scalar_select %p33, 0, %s32
      %s35 = ssub.s32 %s22, %s34
      %p36 = scmp.eq.s32.totalorder %s35, 0
      %s38 = sadd.s32 %s37, 1
      %s39 = scalar_select %p36, %s37, %s38
      %p42 = pneg %p36
      %p43 = scmp.eq.s32.totalorder %s15, 1
      %p44 = por %p42, %p43
      %p45 = scmp.ne.s32.totalorder %s37, %s40
      %p46 = scmp.eq.s32.totalorder %s15, 0
      %p47 = por %p45, %p46
      %p48 = scmp.ne.s32.totalorder %s37, %s40
      %p49 = scmp.eq.s32.totalorder %s20, 1
      %p50 = por %p48, %p49
      %p51 = scmp.ne.s32.totalorder %s40, %s41
      %p52 = scmp.eq.s32.totalorder %s20, 0
      %p53 = por %p51, %p52
      %p54 = scmp.ne.s32.totalorder %s40, %s41
      %p55 = scmp.eq.s32.totalorder %s21, 1
      %p56 = por %p54, %p55
      %p58 = scmp.ne.s32.totalorder %s41, %s57
      %p59 = scmp.eq.s32.totalorder %s21, 0
      %p60 = por %p58, %p59
      %s62 = sadd.s32 %s61, 1
      %p65 = scmp.eq.s32.totalorder %s15, 1
      %p66 = scmp.ne.s32.totalorder %s61, %s63
      %p67 = scmp.eq.s32.totalorder %s15, 0
      %p68 = por %p66, %p67
      %p69 = scmp.ne.s32.totalorder %s61, %s63
      %p70 = scmp.eq.s32.totalorder %s20, 1
      %p71 = por %p69, %p70
      %p72 = scmp.ne.s32.totalorder %s63, %s64
      %p73 = scmp.eq.s32.totalorder %s20, 0
      %p74 = por %p72, %p73
      %p75 = scmp.ne.s32.totalorder %s63, %s64
      %p76 = scmp.eq.s32.totalorder %s21, 1
      %p77 = por %p75, %p76
      %p79 = scmp.ne.s32.totalorder %s64, %s78
      %p80 = scmp.eq.s32.totalorder %s21, 0
      %p81 = por %p79, %p80
      %s83 = sadd.s32 %s82, 1
      %p86 = scmp.eq.s32.totalorder %s15, 1
      %p87 = scmp.ne.s32.totalorder %s82, %s84
      %p88 = scmp.eq.s32.totalorder %s15, 0
      %p89 = por %p87, %p88
      %p90 = scmp.ne.s32.totalorder %s82, %s84
      %p91 = scmp.eq.s32.totalorder %s20, 1
      %p92 = por %p90, %p91
      %p93 = scmp.ne.s32.totalorder %s84, %s85
      %p94 = scmp.eq.s32.totalorder %s20, 0
      %p95 = por %p93, %p94
      %p96 = scmp.ne.s32.totalorder %s84, %s85
      %p97 = scmp.eq.s32.totalorder %s21, 1
      %p98 = por %p96, %p97
      %p100 = scmp.ne.s32.totalorder %s85, %s99
      %p101 = scmp.eq.s32.totalorder %s21, 0
      %p102 = por %p100, %p101
      %s104 = sadd.s32 %s103, 1
      %p107 = scmp.eq.s32.totalorder %s15, 1
      %p108 = scmp.ne.s32.totalorder %s103, %s105
      %p109 = scmp.eq.s32.totalorder %s15, 0
      %p110 = por %p108, %p109
      %p111 = scmp.ne.s32.totalorder %s103, %s105
      %p112 = scmp.eq.s32.totalorder %s20, 1
      %p113 = por %p111, %p112
      %p114 = scmp.ne.s32.totalorder %s105, %s106
      %p115 = scmp.eq.s32.totalorder %s20, 0
      %p116 = por %p114, %p115
      %p117 = scmp.ne.s32.totalorder %s105, %s106
      %p118 = scmp.eq.s32.totalorder %s21, 1
      %p119 = por %p117, %p118
      %p121 = scmp.ne.s32.totalorder %s106, %s120
      %p122 = scmp.eq.s32.totalorder %s21, 0
      %p123 = por %p121, %p122
      %s125 = sadd.s32 %s124, 1
      %p128 = scmp.eq.s32.totalorder %s15, 1
      %p129 = scmp.ne.s32.totalorder %s124, %s126
      %p130 = scmp.eq.s32.totalorder %s15, 0
      %p131 = por %p129, %p130
      %p132 = scmp.ne.s32.totalorder %s124, %s126
      %p133 = scmp.eq.s32.totalorder %s20, 1
      %p134 = por %p132, %p133
      %p135 = scmp.ne.s32.totalorder %s126, %s127
      %p136 = scmp.eq.s32.totalorder %s20, 0
      %p137 = por %p135, %p136
      %p138 = scmp.ne.s32.totalorder %s126, %s127
      %p139 = scmp.eq.s32.totalorder %s21, 1
      %p140 = por %p138, %p139
      %p142 = scmp.ne.s32.totalorder %s127, %s141
      %p143 = scmp.eq.s32.totalorder %s21, 0
      %p144 = por %p142, %p143
      %s146 = sadd.s32 %s145, 1
      %p149 = scmp.eq.s32.totalorder %s15, 1
      %p150 = scmp.ne.s32.totalorder %s145, %s147
      %p151 = scmp.eq.s32.totalorder %s15, 0
      %p152 = por %p150, %p151
      %p153 = scmp.ne.s32.totalorder %s145, %s147
      %p154 = scmp.eq.s32.totalorder %s20, 1
      %p155 = por %p153, %p154
      %p156 = scmp.ne.s32.totalorder %s147, %s148
      %p157 = scmp.eq.s32.totalorder %s20, 0
      %p158 = por %p156, %p157
      %p159 = scmp.ne.s32.totalorder %s147, %s148
      %p160 = scmp.eq.s32.totalorder %s21, 1
      %p161 = por %p159, %p160
      %p163 = scmp.ne.s32.totalorder %s148, %s162
      %p164 = scmp.eq.s32.totalorder %s21, 0
      %p165 = por %p163, %p164
      %s166 = ssub.s32 %s22, %s34
      %s167 = ssub.s32 %s23, %s30
      %s168 = sor.u32 %s166, %s167
      %p169 = scmp.eq.s32.totalorder %s168, 0
      %s171 = sadd.s32 %s170, 1
      %s172 = scalar_select %p169, %s170, %s171
      %p175 = pneg %p169
      %p176 = scmp.eq.s32.totalorder %s15, 1
      %p177 = por %p175, %p176
      %p178 = scmp.ne.s32.totalorder %s170, %s173
      %p179 = scmp.eq.s32.totalorder %s15, 0
      %p180 = por %p178, %p179
      %p181 = scmp.ne.s32.totalorder %s170, %s173
      %p182 = scmp.eq.s32.totalorder %s20, 1
      %p183 = por %p181, %p182
      %p184 = scmp.ne.s32.totalorder %s173, %s174
      %p185 = scmp.eq.s32.totalorder %s20, 0
      %p186 = por %p184, %p185
      %p187 = scmp.ne.s32.totalorder %s173, %s174
      %p188 = scmp.eq.s32.totalorder %s21, 1
      %p189 = por %p187, %p188
      %p191 = scmp.ne.s32.totalorder %s174, %s190
      %p192 = scmp.eq.s32.totalorder %s21, 0
      %p193 = por %p191, %p192
      %p194 = scmp.le.s32.totalorder 1, %s15
      %p195 = scmp.lt.s32.totalorder %s15, 3
      %p196 = pnand %p194, %p195
      %p197 = pneg %p196
      // Predicated region
      $region9: #{tpu_custom_call.1} parent=5 // pred_check
        _
      $region10: #{tpu_custom_call.1} parent=5 // pred_check_branch
        %199 = sbr.rel (%p196) target = $region12
      $region11: #{tpu_custom_call.1} parent=5 // pred_region
        %s200 = ssub.s32 %s15, 1
        // Predicated region
        $region13: #{tpu_custom_call.1} parent=11 // pred_check
          %p201 = pneg %p74
        $region14: #{tpu_custom_call.1} parent=11 // pred_check_branch
          %203 = sbr.rel (%p201) target = $region16
        $region15: #{tpu_custom_call.1} parent=11 // pred_region
          _
        $region16: #{tpu_custom_call.1} parent=11 // pred_fallthru
          _
        // Predicated region
        $region17: #{tpu_custom_call.1} parent=11 // pred_check
          %p204 = pneg %p95
        $region18: #{tpu_custom_call.1} parent=11 // pred_check_branch
          %206 = sbr.rel (%p204) target = $region20
        $region19: #{tpu_custom_call.1} parent=11 // pred_region
          _
        $region20: #{tpu_custom_call.1} parent=11 // pred_fallthru
          _
        // Predicated region
        $region21: #{tpu_custom_call.1} parent=11 // pred_check
          %p207 = pneg %p116
        $region22: #{tpu_custom_call.1} parent=11 // pred_check_branch
          %209 = sbr.rel (%p207) target = $region24
        $region23: #{tpu_custom_call.1} parent=11 // pred_region
          _
        $region24: #{tpu_custom_call.1} parent=11 // pred_fallthru
          _
        // Predicated region
        $region25: #{tpu_custom_call.1} parent=11 // pred_check
          %p210 = pneg %p137
        $region26: #{tpu_custom_call.1} parent=11 // pred_check_branch
          %212 = sbr.rel (%p210) target = $region28
        $region27: #{tpu_custom_call.1} parent=11 // pred_region
          _
        $region28: #{tpu_custom_call.1} parent=11 // pred_fallthru
          _
        // Predicated region
        $region29: #{tpu_custom_call.1} parent=11 // pred_check
          %p213 = pneg %p158
        $region30: #{tpu_custom_call.1} parent=11 // pred_check_branch
          %215 = sbr.rel (%p213) target = $region32
        $region31: #{tpu_custom_call.1} parent=11 // pred_region
          _
        $region32: #{tpu_custom_call.1} parent=11 // pred_fallthru
          _
      $region12: #{tpu_custom_call.1} parent=5 // pred_fallthru
        _
      %p216 = scmp.lt.s32.totalorder %s15, 2
      // Predicated region
      $region33: #{tpu_custom_call.1} parent=5 // pred_check
        %p217 = pneg %p216
      $region34: #{tpu_custom_call.1} parent=5 // pred_check_branch
        %219 = sbr.rel (%p217) target = $region36
      $region35: #{tpu_custom_call.1} parent=5 // pred_region
        // Predicated region
        $region37: #{tpu_custom_call.1} parent=35 // pred_check
          %p220 = pneg %p47
        $region38: #{tpu_custom_call.1} parent=35 // pred_check_branch
          %222 = sbr.rel (%p220) target = $region40
        $region39: #{tpu_custom_call.1} parent=35 // pred_region
          %p223 = scmp.lt.s32.totalorder %s22, 1
          %s224 = scalar_select %p223, %s22, 1
          %s225 = smul.addr %s224, 72
          %s226 = smul.addr %s225, 8
          %s227 = scalar_lea.vmem %s0, %s226
        $region40: #{tpu_custom_call.1} parent=35 // pred_fallthru
          _
      $region36: #{tpu_custom_call.1} parent=5 // pred_fallthru
        _
      %p228 = scmp.le.s32.totalorder 1, %s15
      %p229 = scmp.lt.s32.totalorder %s15, 3
      %p230 = pnand %p228, %p229
      %p231 = pneg %p230
      // Predicated region
      $region41: #{tpu_custom_call.1} parent=5 // pred_check
        _
      $region42: #{tpu_custom_call.1} parent=5 // pred_check_branch
        %233 = sbr.rel (%p230) target = $region44
      $region43: #{tpu_custom_call.1} parent=5 // pred_region
        %s234 = ssub.s32 %s15, 1
        %p235 = scmp.lt.s32.totalorder %s24, 1
        %s236 = scalar_select %p235, %s24, 1
        %s237 = smul.addr %s236, 72
        %s238 = smul.addr %s237, 8
        %s239 = scalar_lea.vmem %s0, %s238
        %p240 = pneg %p53
        %p241 = pneg %p50
        %p242 = pneg %p74
        %p243 = pneg %p71
        %p244 = pneg %p95
        %p245 = pneg %p92
        %p246 = pneg %p116
        %p247 = pneg %p113
        %p248 = pneg %p137
        %p249 = pneg %p134
        %p250 = pneg %p158
        %p251 = pneg %p155
        %p252 = pneg %p186
        %p253 = pneg %p183
        %s254 = sand.u32 %s173, 1
        %s255 = scalar_lea.sflag [#allocation4], %s254
        %s256 = sand.u32 %s173, 1
        %s257 = smul.addr %s256, 32
        %s258 = scalar_lea.vmem [#allocation3], %s257
        %p259 = scmp.lt.s32.totalorder %s24, 1
        %s260 = scalar_select %p259, %s24, 1
        %s261 = smul.addr %s260, 72
        %s262 = smul.addr %s261, 8
        %s263 = scalar_lea.vmem %s0, %s262
        %s264 = smul.u32 8, %s25
        %v265 = vld [vmem:[%s2] sm:$0x1]
        %v266 = vld [vmem:[%s3] sm:$0x1]
        %v267 = vld [vmem:[%s263] sm:$0xff]
        %v268 = vld [vmem:[%s263 + $0x20] sm:$0x1]
        %v269 = vld [vmem:[%s263 + $0x40] sm:$0xff]
        %v270 = vld [vmem:[%s263 + $0x60] sm:$0x1]
        %v271 = vld [vmem:[%s263 + $0x80] sm:$0xff]
        %v272 = vld [vmem:[%s263 + $0xa0] sm:$0x1]
        %v273 = vld [vmem:[%s263 + $0xc0] sm:$0xff]
        %v274 = vld [vmem:[%s263 + $0xe0] sm:$0x1]
        %v275 = vld [vmem:[%s263 + $0x100] sm:$0xff]
        %v276 = vld [vmem:[%s263 + $0x120] sm:$0x1]
        %v277 = vld [vmem:[%s263 + $0x140] sm:$0xff]
        %v278 = vld [vmem:[%s263 + $0x160] sm:$0x1]
        %v279 = vld [vmem:[%s263 + $0x180] sm:$0xff]
        %v280 = vld [vmem:[%s263 + $0x1a0] sm:$0x1]
        %v281 = vld [vmem:[%s263 + $0x1c0] sm:$0xff]
        %v282 = vld [vmem:[%s263 + $0x1e0] sm:$0x1]
        %v283 = vld [vmem:[%s263 + $0x200] sm:$0xff]
        %v284 = vld [vmem:[%s263 + $0x220] sm:$0x1]
        %v286 = vperm.slane %v265, 0
        %v288 = vmul.f32 %v267, %v286
        %v289 = vmul.f32 %v268, %v286
        %v290 = vmul.f32 %v269, %v286
        %v291 = vmul.f32 %v270, %v286
        %v292 = vmul.f32 %v271, %v286
        %v293 = vmul.f32 %v272, %v286
        %v294 = vmul.f32 %v273, %v286
        %v295 = vmul.f32 %v274, %v286
        %v296 = vmul.f32 %v275, %v286
        %v297 = vmul.f32 %v276, %v286
        %v298 = vmul.f32 %v277, %v286
        %v299 = vmul.f32 %v278, %v286
        %v300 = vmul.f32 %v279, %v286
        %v301 = vmul.f32 %v280, %v286
        %v302 = vmul.f32 %v281, %v286
        %v303 = vmul.f32 %v282, %v286
        %v304 = vmul.f32 %v283, %v286
        %v305 = vmul.f32 %v284, %v286
        %v307 = vperm.slane %v266, 0
        %v309 = vadd.f32 %v288, %v307
        %v310 = vadd.f32 %v289, %v307
        %v311 = vadd.f32 %v290, %v307
        %v312 = vadd.f32 %v291, %v307
        %v313 = vadd.f32 %v292, %v307
        %v314 = vadd.f32 %v293, %v307
        %v315 = vadd.f32 %v294, %v307
        %v316 = vadd.f32 %v295, %v307
        %v317 = vadd.f32 %v296, %v307
        %v318 = vadd.f32 %v297, %v307
        %v319 = vadd.f32 %v298, %v307
        %v320 = vadd.f32 %v299, %v307
        %v321 = vadd.f32 %v300, %v307
        %v322 = vadd.f32 %v301, %v307
        %v323 = vadd.f32 %v302, %v307
        %v324 = vadd.f32 %v303, %v307
        %v325 = vadd.f32 %v304, %v307
        %v326 = vadd.f32 %v305, %v307
        %v327 = vmax.f32 %v309, 0.0
        %v328 = vmax.f32 %v310, 0.0
        %v329 = vmax.f32 %v311, 0.0
        %v330 = vmax.f32 %v312, 0.0
        %v331 = vmax.f32 %v313, 0.0
        %v332 = vmax.f32 %v314, 0.0
        %v333 = vmax.f32 %v315, 0.0
        %v334 = vmax.f32 %v316, 0.0
        %v335 = vmax.f32 %v317, 0.0
        %v336 = vmax.f32 %v318, 0.0
        %v337 = vmax.f32 %v319, 0.0
        %v338 = vmax.f32 %v320, 0.0
        %v339 = vmax.f32 %v321, 0.0
        %v340 = vmax.f32 %v322, 0.0
        %v341 = vmax.f32 %v323, 0.0
        %v342 = vmax.f32 %v324, 0.0
        %v343 = vmax.f32 %v325, 0.0
        %v344 = vmax.f32 %v326, 0.0
        %v345 = vlaneseq
        %v346 = vshrl.u32 %v345, 7
        %v347 = vadd.s32 %v346, 8
        %v348 = vmul.u32 %v346, 2
        %v349 = vmul.u32 %v347, 2
        %vm350 = vcmp.ge.s32.totalorder %v348, 1
        %vm351 = vcmp.ge.s32.totalorder %v349, 1
        %vm352 = vmand 0, %vm350
        %vm353 = vmand 0, %vm351
        %vm354 = vmand 1, %vm350
        %vm355 = vmand 1, %vm351
        %vm356 = vcmp.le.s32.totalorder %v348, 16
        %vm357 = vcmp.le.s32.totalorder %v349, 16
        %vm358 = vmand %vm352, %vm356
        %vm359 = vmand %vm353, %vm357
        %vm360 = vmand %vm354, %vm356
        %vm361 = vmand %vm355, %vm357
        %v362 = vsel %vm358, %v327, 0.0
        %v363 = vsel %vm359, %v328, 0.0
        %v364 = vsel %vm360, %v329, 0.0
        %v365 = vsel %vm361, %v330, 0.0
        %v366 = vsel %vm360, %v331, 0.0
        %v367 = vsel %vm361, %v332, 0.0
        %v368 = vsel %vm360, %v333, 0.0
        %v369 = vsel %vm361, %v334, 0.0
        %v370 = vsel %vm360, %v335, 0.0
        %v371 = vsel %vm361, %v336, 0.0
        %v372 = vsel %vm360, %v337, 0.0
        %v373 = vsel %vm361, %v338, 0.0
        %v374 = vsel %vm360, %v339, 0.0
        %v375 = vsel %vm361, %v340, 0.0
        %v376 = vsel %vm360, %v341, 0.0
        %v377 = vsel %vm361, %v342, 0.0
        %v378 = vsel %vm360, %v343, 0.0
        %v379 = vsel %vm361, %v344, 0.0
        %v380 = vpack.c.bf16 %v362, %v362
        %v381 = vpack.c.bf16 %v363, %v363
        %v382 = vpack.c.bf16 %v364, %v364
        %v383 = vpack.c.bf16 %v365, %v365
        %v384 = vpack.c.bf16 %v366, %v366
        %v385 = vpack.c.bf16 %v367, %v367
        %v386 = vpack.c.bf16 %v368, %v368
        %v387 = vpack.c.bf16 %v369, %v369
        %v388 = vpack.c.bf16 %v370, %v370
        %v389 = vpack.c.bf16 %v371, %v371
        %v390 = vpack.c.bf16 %v372, %v372
        %v391 = vpack.c.bf16 %v373, %v373
        %v392 = vpack.c.bf16 %v374, %v374
        %v393 = vpack.c.bf16 %v375, %v375
        %v394 = vpack.c.bf16 %v376, %v376
        %v395 = vpack.c.bf16 %v377, %v377
        %v396 = vpack.c.bf16 %v378, %v378
        %v397 = vpack.c.bf16 %v379, %v379
        %398 = vst [vmem:[#allocation2] sm:$0xf] %v380
        %vm399 = vcmask 1040384
        %vm400 = vsmask.f32 256
        %vm401 = vmand %vm399, %vm400
        %v402 = vld [vmem:[#allocation2 + $0x4] sm:$0x1]
        %v403 = vsel %vm401, %v381, %v402
        %404 = vst [vmem:[#allocation2 + $0x4] sm:$0x1] %v403
        %405 = vst [vmem:[#allocation2 + $0x8] sm:$0xf] %v382
        %v406 = vld [vmem:[#allocation2 + $0xc] sm:$0x1]
        %v407 = vsel %vm401, %v383, %v406
        %408 = vst [vmem:[#allocation2 + $0xc] sm:$0x1] %v407
        %409 = vst [vmem:[#allocation2 + $0x10] sm:$0xf] %v384
        %v410 = vld [vmem:[#allocation2 + $0x14] sm:$0x1]
        %v411 = vsel %vm401, %v385, %v410
        %412 = vst [vmem:[#allocation2 + $0x14] sm:$0x1] %v411
        %413 = vst [vmem:[#allocation2 + $0x18] sm:$0xf] %v386
        %v414 = vld [vmem:[#allocation2 + $0x1c] sm:$0x1]
        %v415 = vsel %vm401, %v387, %v414
        %416 = vst [vmem:[#allocation2 + $0x1c] sm:$0x1] %v415
        %417 = vst [vmem:[#allocation2 + $0x20] sm:$0xf] %v388
        %v418 = vld [vmem:[#allocation2 + $0x24] sm:$0x1]
        %v419 = vsel %vm401, %v389, %v418
        %420 = vst [vmem:[#allocation2 + $0x24] sm:$0x1] %v419
        %421 = vst [vmem:[#allocation2 + $0x28] sm:$0xf] %v390
        %v422 = vld [vmem:[#allocation2 + $0x2c] sm:$0x1]
        %v423 = vsel %vm401, %v391, %v422
        %424 = vst [vmem:[#allocation2 + $0x2c] sm:$0x1] %v423
        %425 = vst [vmem:[#allocation2 + $0x30] sm:$0xf] %v392
        %v426 = vld [vmem:[#allocation2 + $0x34] sm:$0x1]
        %v427 = vsel %vm401, %v393, %v426
        %428 = vst [vmem:[#allocation2 + $0x34] sm:$0x1] %v427
        %429 = vst [vmem:[#allocation2 + $0x38] sm:$0xf] %v394
        %v430 = vld [vmem:[#allocation2 + $0x3c] sm:$0x1]
        %v431 = vsel %vm401, %v395, %v430
        %432 = vst [vmem:[#allocation2 + $0x3c] sm:$0x1] %v431
        %433 = vst [vmem:[#allocation2 + $0x40] sm:$0xf] %v396
        %v434 = vld [vmem:[#allocation2 + $0x44] sm:$0x1]
        %v435 = vsel %vm401, %v397, %v434
        %436 = vst [vmem:[#allocation2 + $0x44] sm:$0x1] %v435
        %v437 = vld [vmem:[%s263 + $0x8] sm:$0xff]
        %v438 = vld [vmem:[%s263 + $0x28] sm:$0x1]
        %v439 = vld [vmem:[%s263 + $0x48] sm:$0xff]
        %v440 = vld [vmem:[%s263 + $0x68] sm:$0x1]
        %v441 = vld [vmem:[%s263 + $0x88] sm:$0xff]
        %v442 = vld [vmem:[%s263 + $0xa8] sm:$0x1]
        %v443 = vld [vmem:[%s263 + $0xc8] sm:$0xff]
        %v444 = vld [vmem:[%s263 + $0xe8] sm:$0x1]
        %v445 = vld [vmem:[%s263 + $0x108] sm:$0xff]
        %v446 = vld [vmem:[%s263 + $0x128] sm:$0x1]
        %v447 = vld [vmem:[%s263 + $0x148] sm:$0xff]
        %v448 = vld [vmem:[%s263 + $0x168] sm:$0x1]
        %v449 = vld [vmem:[%s263 + $0x188] sm:$0xff]
        %v450 = vld [vmem:[%s263 + $0x1a8] sm:$0x1]
        %v451 = vld [vmem:[%s263 + $0x1c8] sm:$0xff]
        %v452 = vld [vmem:[%s263 + $0x1e8] sm:$0x1]
        %v453 = vld [vmem:[%s263 + $0x208] sm:$0xff]
        %v454 = vld [vmem:[%s263 + $0x228] sm:$0x1]
        %v455 = vmul.f32 %v437, %v286
        %v456 = vmul.f32 %v438, %v286
        %v457 = vmul.f32 %v439, %v286
        %v458 = vmul.f32 %v440, %v286
        %v459 = vmul.f32 %v441, %v286
        %v460 = vmul.f32 %v442, %v286
        %v461 = vmul.f32 %v443, %v286
        %v462 = vmul.f32 %v444, %v286
        %v463 = vmul.f32 %v445, %v286
        %v464 = vmul.f32 %v446, %v286
        %v465 = vmul.f32 %v447, %v286
        %v466 = vmul.f32 %v448, %v286
        %v467 = vmul.f32 %v449, %v286
        %v468 = vmul.f32 %v450, %v286
        %v469 = vmul.f32 %v451, %v286
        %v470 = vmul.f32 %v452, %v286
        %v471 = vmul.f32 %v453, %v286
        %v472 = vmul.f32 %v454, %v286
        %v473 = vadd.f32 %v455, %v307
        %v474 = vadd.f32 %v456, %v307
        %v475 = vadd.f32 %v457, %v307
        %v476 = vadd.f32 %v458, %v307
        %v477 = vadd.f32 %v459, %v307
        %v478 = vadd.f32 %v460, %v307
        %v479 = vadd.f32 %v461, %v307
        %v480 = vadd.f32 %v462, %v307
        %v481 = vadd.f32 %v463, %v307
        %v482 = vadd.f32 %v464, %v307
        %v483 = vadd.f32 %v465, %v307
        %v484 = vadd.f32 %v466, %v307
        %v485 = vadd.f32 %v467, %v307
        %v486 = vadd.f32 %v468, %v307
        %v487 = vadd.f32 %v469, %v307
        %v488 = vadd.f32 %v470, %v307
        %v489 = vadd.f32 %v471, %v307
        %v490 = vadd.f32 %v472, %v307
        %v491 = vmax.f32 %v473, 0.0
        %v492 = vmax.f32 %v474, 0.0
        %v493 = vmax.f32 %v475, 0.0
        %v494 = vmax.f32 %v476, 0.0
        %v495 = vmax.f32 %v477, 0.0
        %v496 = vmax.f32 %v478, 0.0
        %v497 = vmax.f32 %v479, 0.0
        %v498 = vmax.f32 %v480, 0.0
        %v499 = vmax.f32 %v481, 0.0
        %v500 = vmax.f32 %v482, 0.0
        %v501 = vmax.f32 %v483, 0.0
        %v502 = vmax.f32 %v484, 0.0
        %v503 = vmax.f32 %v485, 0.0
        %v504 = vmax.f32 %v486, 0.0
        %v505 = vmax.f32 %v487, 0.0
        %v506 = vmax.f32 %v488, 0.0
        %v507 = vmax.f32 %v489, 0.0
        %v508 = vmax.f32 %v490, 0.0
        %v509 = vadd.s32 %v348, 1
        %v510 = vadd.s32 %v349, 1
        %vm511 = vcmp.ge.s32.totalorder %v509, 1
        %vm512 = vcmp.ge.s32.totalorder %v510, 1
        %vm513 = vmand 0, %vm511
        %vm514 = vmand 0, %vm512
        %vm515 = vmand 1, %vm511
        %vm516 = vmand 1, %vm512
        %vm517 = vcmp.le.s32.totalorder %v509, 16
        %vm518 = vcmp.le.s32.totalorder %v510, 16
        %vm519 = vmand %vm513, %vm517
        %vm520 = vmand %vm514, %vm518
        %vm521 = vmand %vm515, %vm517
        %vm522 = vmand %vm516, %vm518
        %v523 = vsel %vm519, %v491, 0.0
        %v524 = vsel %vm520, %v492, 0.0
        %v525 = vsel %vm521, %v493, 0.0
        %v526 = vsel %vm522, %v494, 0.0
        %v527 = vsel %vm521, %v495, 0.0
        %v528 = vsel %vm522, %v496, 0.0
        %v529 = vsel %vm521, %v497, 0.0
        %v530 = vsel %vm522, %v498, 0.0
        %v531 = vsel %vm521, %v499, 0.0
        %v532 = vsel %vm522, %v500, 0.0
        %v533 = vsel %vm521, %v501, 0.0
        %v534 = vsel %vm522, %v502, 0.0
        %v535 = vsel %vm521, %v503, 0.0
        %v536 = vsel %vm522, %v504, 0.0
        %v537 = vsel %vm521, %v505, 0.0
        %v538 = vsel %vm522, %v506, 0.0
        %v539 = vsel %vm521, %v507, 0.0
        %v540 = vsel %vm522, %v508, 0.0
        %v541 = vpack.c.bf16 %v523, %v523
        %v542 = vpack.c.bf16 %v524, %v524
        %v543 = vpack.c.bf16 %v525, %v525
        %v544 = vpack.c.bf16 %v526, %v526
        %v545 = vpack.c.bf16 %v527, %v527
        %v546 = vpack.c.bf16 %v528, %v528
        %v547 = vpack.c.bf16 %v529, %v529
        %v548 = vpack.c.bf16 %v530, %v530
        %v549 = vpack.c.bf16 %v531, %v531
        %v550 = vpack.c.bf16 %v532, %v532
        %v551 = vpack.c.bf16 %v533, %v533
        %v552 = vpack.c.bf16 %v534, %v534
        %v553 = vpack.c.bf16 %v535, %v535
        %v554 = vpack.c.bf16 %v536, %v536
        %v555 = vpack.c.bf16 %v537, %v537
        %v556 = vpack.c.bf16 %v538, %v538
        %v557 = vpack.c.bf16 %v539, %v539
        %v558 = vpack.c.bf16 %v540, %v540
        %s559 = scalar_lea.vmem [#allocation2], 72
        %560 = vst [vmem:[%s559] sm:$0xf] %v541
        %v561 = vld [vmem:[%s559 + $0x4] sm:$0x1]
        %v562 = vsel %vm401, %v542, %v561
        %563 = vst [vmem:[%s559 + $0x4] sm:$0x1] %v562
        %564 = vst [vmem:[%s559 + $0x8] sm:$0xf] %v543
        %v565 = vld [vmem:[%s559 + $0xc] sm:$0x1]
        %v566 = vsel %vm401, %v544, %v565
        %567 = vst [vmem:[%s559 + $0xc] sm:$0x1] %v566
        %568 = vst [vmem:[%s559 + $0x10] sm:$0xf] %v545
        %v569 = vld [vmem:[%s559 + $0x14] sm:$0x1]
        %v570 = vsel %vm401, %v546, %v569
        %571 = vst [vmem:[%s559 + $0x14] sm:$0x1] %v570
        %572 = vst [vmem:[%s559 + $0x18] sm:$0xf] %v547
        %v573 = vld [vmem:[%s559 + $0x1c] sm:$0x1]
        %v574 = vsel %vm401, %v548, %v573
        %575 = vst [vmem:[%s559 + $0x1c] sm:$0x1] %v574
        %576 = vst [vmem:[%s559 + $0x20] sm:$0xf] %v549
        %v577 = vld [vmem:[%s559 + $0x24] sm:$0x1]
        %v578 = vsel %vm401, %v550, %v577
        %579 = vst [vmem:[%s559 + $0x24] sm:$0x1] %v578
        %580 = vst [vmem:[%s559 + $0x28] sm:$0xf] %v551
        %v581 = vld [vmem:[%s559 + $0x2c] sm:$0x1]
        %v582 = vsel %vm401, %v552, %v581
        %583 = vst [vmem:[%s559 + $0x2c] sm:$0x1] %v582
        %584 = vst [vmem:[%s559 + $0x30] sm:$0xf] %v553
        %v585 = vld [vmem:[%s559 + $0x34] sm:$0x1]
        %v586 = vsel %vm401, %v554, %v585
        %587 = vst [vmem:[%s559 + $0x34] sm:$0x1] %v586
        %588 = vst [vmem:[%s559 + $0x38] sm:$0xf] %v555
        %v589 = vld [vmem:[%s559 + $0x3c] sm:$0x1]
        %v590 = vsel %vm401, %v556, %v589
        %591 = vst [vmem:[%s559 + $0x3c] sm:$0x1] %v590
        %592 = vst [vmem:[%s559 + $0x40] sm:$0xf] %v557
        %v593 = vld [vmem:[%s559 + $0x44] sm:$0x1]
        %v594 = vsel %vm401, %v558, %v593
        %595 = vst [vmem:[%s559 + $0x44] sm:$0x1] %v594
        %v596 = vld [vmem:[%s263 + $0x10] sm:$0xff]
        %v597 = vld [vmem:[%s263 + $0x30] sm:$0x1]
        %v598 = vld [vmem:[%s263 + $0x50] sm:$0xff]
        %v599 = vld [vmem:[%s263 + $0x70] sm:$0x1]
        %v600 = vld [vmem:[%s263 + $0x90] sm:$0xff]
        %v601 = vld [vmem:[%s263 + $0xb0] sm:$0x1]
        %v602 = vld [vmem:[%s263 + $0xd0] sm:$0xff]
        %v603 = vld [vmem:[%s263 + $0xf0] sm:$0x1]
        %v604 = vld [vmem:[%s263 + $0x110] sm:$0xff]
        %v605 = vld [vmem:[%s263 + $0x130] sm:$0x1]
        %v606 = vld [vmem:[%s263 + $0x150] sm:$0xff]
        %v607 = vld [vmem:[%s263 + $0x170] sm:$0x1]
        %v608 = vld [vmem:[%s263 + $0x190] sm:$0xff]
        %v609 = vld [vmem:[%s263 + $0x1b0] sm:$0x1]
        %v610 = vld [vmem:[%s263 + $0x1d0] sm:$0xff]
        %v611 = vld [vmem:[%s263 + $0x1f0] sm:$0x1]
        %v612 = vld [vmem:[%s263 + $0x210] sm:$0xff]
        %v613 = vld [vmem:[%s263 + $0x230] sm:$0x1]
        %v614 = vmul.f32 %v596, %v286
        %v615 = vmul.f32 %v597, %v286
        %v616 = vmul.f32 %v598, %v286
        %v617 = vmul.f32 %v599, %v286
        %v618 = vmul.f32 %v600, %v286
        %v619 = vmul.f32 %v601, %v286
        %v620 = vmul.f32 %v602, %v286
        %v621 = vmul.f32 %v603, %v286
        %v622 = vmul.f32 %v604, %v286
        %v623 = vmul.f32 %v605, %v286
        %v624 = vmul.f32 %v606, %v286
        %v625 = vmul.f32 %v607, %v286
        %v626 = vmul.f32 %v608, %v286
        %v627 = vmul.f32 %v609, %v286
        %v628 = vmul.f32 %v610, %v286
        %v629 = vmul.f32 %v611, %v286
        %v630 = vmul.f32 %v612, %v286
        %v631 = vmul.f32 %v613, %v286
        %v632 = vadd.f32 %v614, %v307
        %v633 = vadd.f32 %v615, %v307
        %v634 = vadd.f32 %v616, %v307
        %v635 = vadd.f32 %v617, %v307
        %v636 = vadd.f32 %v618, %v307
        %v637 = vadd.f32 %v619, %v307
        %v638 = vadd.f32 %v620, %v307
        %v639 = vadd.f32 %v621, %v307
        %v640 = vadd.f32 %v622, %v307
        %v641 = vadd.f32 %v623, %v307
        %v642 = vadd.f32 %v624, %v307
        %v643 = vadd.f32 %v625, %v307
        %v644 = vadd.f32 %v626, %v307
        %v645 = vadd.f32 %v627, %v307
        %v646 = vadd.f32 %v628, %v307
        %v647 = vadd.f32 %v629, %v307
        %v648 = vadd.f32 %v630, %v307
        %v649 = vadd.f32 %v631, %v307
        %v650 = vmax.f32 %v632, 0.0
        %v651 = vmax.f32 %v633, 0.0
        %v652 = vmax.f32 %v634, 0.0
        %v653 = vmax.f32 %v635, 0.0
        %v654 = vmax.f32 %v636, 0.0
        %v655 = vmax.f32 %v637, 0.0
        %v656 = vmax.f32 %v638, 0.0
        %v657 = vmax.f32 %v639, 0.0
        %v658 = vmax.f32 %v640, 0.0
        %v659 = vmax.f32 %v641, 0.0
        %v660 = vmax.f32 %v642, 0.0
        %v661 = vmax.f32 %v643, 0.0
        %v662 = vmax.f32 %v644, 0.0
        %v663 = vmax.f32 %v645, 0.0
        %v664 = vmax.f32 %v646, 0.0
        %v665 = vmax.f32 %v647, 0.0
        %v666 = vmax.f32 %v648, 0.0
        %v667 = vmax.f32 %v649, 0.0
        %v668 = vsel %vm360, %v650, 0.0
        %v669 = vsel %vm361, %v651, 0.0
        %v670 = vsel %vm360, %v652, 0.0
        %v671 = vsel %vm361, %v653, 0.0
        %v672 = vsel %vm360, %v654, 0.0
        %v673 = vsel %vm361, %v655, 0.0
        %v674 = vsel %vm360, %v656, 0.0
        %v675 = vsel %vm361, %v657, 0.0
        %v676 = vsel %vm360, %v658, 0.0
        %v677 = vsel %vm361, %v659, 0.0
        %v678 = vsel %vm360, %v660, 0.0
        %v679 = vsel %vm361, %v661, 0.0
        %v680 = vsel %vm360, %v662, 0.0
        %v681 = vsel %vm361, %v663, 0.0
        %v682 = vsel %vm360, %v664, 0.0
        %v683 = vsel %vm361, %v665, 0.0
        %v684 = vsel %vm358, %v666, 0.0
        %v685 = vsel %vm359, %v667, 0.0
        %v686 = vpack.c.bf16 %v668, %v668
        %v687 = vpack.c.bf16 %v669, %v669
        %v688 = vpack.c.bf16 %v670, %v670
        %v689 = vpack.c.bf16 %v671, %v671
        %v690 = vpack.c.bf16 %v672, %v672
        %v691 = vpack.c.bf16 %v673, %v673
        %v692 = vpack.c.bf16 %v674, %v674
        %v693 = vpack.c.bf16 %v675, %v675
        %v694 = vpack.c.bf16 %v676, %v676
        %v695 = vpack.c.bf16 %v677, %v677
        %v696 = vpack.c.bf16 %v678, %v678
        %v697 = vpack.c.bf16 %v679, %v679
        %v698 = vpack.c.bf16 %v680, %v680
        %v699 = vpack.c.bf16 %v681, %v681
        %v700 = vpack.c.bf16 %v682, %v682
        %v701 = vpack.c.bf16 %v683, %v683
        %v702 = vpack.c.bf16 %v684, %v684
        %v703 = vpack.c.bf16 %v685, %v685
        %s704 = scalar_lea.vmem [#allocation2], 144
        %705 = vst [vmem:[%s704] sm:$0xf] %v686
        %v706 = vld [vmem:[%s704 + $0x4] sm:$0x1]
        %v707 = vsel %vm401, %v687, %v706
        %708 = vst [vmem:[%s704 + $0x4] sm:$0x1] %v707
        %709 = vst [vmem:[%s704 + $0x8] sm:$0xf] %v688
        %v710 = vld [vmem:[%s704 + $0xc] sm:$0x1]
        %v711 = vsel %vm401, %v689, %v710
        %712 = vst [vmem:[%s704 + $0xc] sm:$0x1] %v711
        %713 = vst [vmem:[%s704 + $0x10] sm:$0xf] %v690
        %v714 = vld [vmem:[%s704 + $0x14] sm:$0x1]
        %v715 = vsel %vm401, %v691, %v714
        %716 = vst [vmem:[%s704 + $0x14] sm:$0x1] %v715
        %717 = vst [vmem:[%s704 + $0x18] sm:$0xf] %v692
        %v718 = vld [vmem:[%s704 + $0x1c] sm:$0x1]
        %v719 = vsel %vm401, %v693, %v718
        %720 = vst [vmem:[%s704 + $0x1c] sm:$0x1] %v719
        %721 = vst [vmem:[%s704 + $0x20] sm:$0xf] %v694
        %v722 = vld [vmem:[%s704 + $0x24] sm:$0x1]
        %v723 = vsel %vm401, %v695, %v722
        %724 = vst [vmem:[%s704 + $0x24] sm:$0x1] %v723
        %725 = vst [vmem:[%s704 + $0x28] sm:$0xf] %v696
        %v726 = vld [vmem:[%s704 + $0x2c] sm:$0x1]
        %v727 = vsel %vm401, %v697, %v726
        %728 = vst [vmem:[%s704 + $0x2c] sm:$0x1] %v727
        %729 = vst [vmem:[%s704 + $0x30] sm:$0xf] %v698
        %v730 = vld [vmem:[%s704 + $0x34] sm:$0x1]
        %v731 = vsel %vm401, %v699, %v730
        %732 = vst [vmem:[%s704 + $0x34] sm:$0x1] %v731
        %733 = vst [vmem:[%s704 + $0x38] sm:$0xf] %v700
        %v734 = vld [vmem:[%s704 + $0x3c] sm:$0x1]
        %v735 = vsel %vm401, %v701, %v734
        %736 = vst [vmem:[%s704 + $0x3c] sm:$0x1] %v735
        %737 = vst [vmem:[%s704 + $0x40] sm:$0xf] %v702
        %v738 = vld [vmem:[%s704 + $0x44] sm:$0x1]
        %v739 = vsel %vm401, %v703, %v738
        %740 = vst [vmem:[%s704 + $0x44] sm:$0x1] %v739
        %v741 = vld [vmem:[%s263 + $0x18] sm:$0xff]
        %v742 = vld [vmem:[%s263 + $0x38] sm:$0x1]
        %v743 = vld [vmem:[%s263 + $0x58] sm:$0xff]
        %v744 = vld [vmem:[%s263 + $0x78] sm:$0x1]
        %v745 = vld [vmem:[%s263 + $0x98] sm:$0xff]
        %v746 = vld [vmem:[%s263 + $0xb8] sm:$0x1]
        %v747 = vld [vmem:[%s263 + $0xd8] sm:$0xff]
        %v748 = vld [vmem:[%s263 + $0xf8] sm:$0x1]
        %v749 = vld [vmem:[%s263 + $0x118] sm:$0xff]
        %v750 = vld [vmem:[%s263 + $0x138] sm:$0x1]
        %v751 = vld [vmem:[%s263 + $0x158] sm:$0xff]
        %v752 = vld [vmem:[%s263 + $0x178] sm:$0x1]
        %v753 = vld [vmem:[%s263 + $0x198] sm:$0xff]
        %v754 = vld [vmem:[%s263 + $0x1b8] sm:$0x1]
        %v755 = vld [vmem:[%s263 + $0x1d8] sm:$0xff]
        %v756 = vld [vmem:[%s263 + $0x1f8] sm:$0x1]
        %v757 = vld [vmem:[%s263 + $0x218] sm:$0xff]
        %v758 = vld [vmem:[%s263 + $0x238] sm:$0x1]
        %v759 = vmul.f32 %v741, %v286
        %v760 = vmul.f32 %v742, %v286
        %v761 = vmul.f32 %v743, %v286
        %v762 = vmul.f32 %v744, %v286
        %v763 = vmul.f32 %v745, %v286
        %v764 = vmul.f32 %v746, %v286
        %v765 = vmul.f32 %v747, %v286
        %v766 = vmul.f32 %v748, %v286
        %v767 = vmul.f32 %v749, %v286
        %v768 = vmul.f32 %v750, %v286
        %v769 = vmul.f32 %v751, %v286
        %v770 = vmul.f32 %v752, %v286
        %v771 = vmul.f32 %v753, %v286
        %v772 = vmul.f32 %v754, %v286
        %v773 = vmul.f32 %v755, %v286
        %v774 = vmul.f32 %v756, %v286
        %v775 = vmul.f32 %v757, %v286
        %v776 = vmul.f32 %v758, %v286
        %v777 = vadd.f32 %v759, %v307
        %v778 = vadd.f32 %v760, %v307
        %v779 = vadd.f32 %v761, %v307
        %v780 = vadd.f32 %v762, %v307
        %v781 = vadd.f32 %v763, %v307
        %v782 = vadd.f32 %v764, %v307
        %v783 = vadd.f32 %v765, %v307
        %v784 = vadd.f32 %v766, %v307
        %v785 = vadd.f32 %v767, %v307
        %v786 = vadd.f32 %v768, %v307
        %v787 = vadd.f32 %v769, %v307
        %v788 = vadd.f32 %v770, %v307
        %v789 = vadd.f32 %v771, %v307
        %v790 = vadd.f32 %v772, %v307
        %v791 = vadd.f32 %v773, %v307
        %v792 = vadd.f32 %v774, %v307
        %v793 = vadd.f32 %v775, %v307
        %v794 = vadd.f32 %v776, %v307
        %v795 = vmax.f32 %v777, 0.0
        %v796 = vmax.f32 %v778, 0.0
        %v797 = vmax.f32 %v779, 0.0
        %v798 = vmax.f32 %v780, 0.0
        %v799 = vmax.f32 %v781, 0.0
        %v800 = vmax.f32 %v782, 0.0
        %v801 = vmax.f32 %v783, 0.0
        %v802 = vmax.f32 %v784, 0.0
        %v803 = vmax.f32 %v785, 0.0
        %v804 = vmax.f32 %v786, 0.0
        %v805 = vmax.f32 %v787, 0.0
        %v806 = vmax.f32 %v788, 0.0
        %v807 = vmax.f32 %v789, 0.0
        %v808 = vmax.f32 %v790, 0.0
        %v809 = vmax.f32 %v791, 0.0
        %v810 = vmax.f32 %v792, 0.0
        %v811 = vmax.f32 %v793, 0.0
        %v812 = vmax.f32 %v794, 0.0
        %v813 = vsel %vm521, %v795, 0.0
        %v814 = vsel %vm522, %v796, 0.0
        %v815 = vsel %vm521, %v797, 0.0
        %v816 = vsel %vm522, %v798, 0.0
        %v817 = vsel %vm521, %v799, 0.0
        %v818 = vsel %vm522, %v800, 0.0
        %v819 = vsel %vm521, %v801, 0.0
        %v820 = vsel %vm522, %v802, 0.0
        %v821 = vsel %vm521, %v803, 0.0
        %v822 = vsel %vm522, %v804, 0.0
        %v823 = vsel %vm521, %v805, 0.0
        %v824 = vsel %vm522, %v806, 0.0
        %v825 = vsel %vm521, %v807, 0.0
        %v826 = vsel %vm522, %v808, 0.0
        %v827 = vsel %vm521, %v809, 0.0
        %v828 = vsel %vm522, %v810, 0.0
        %v829 = vsel %vm519, %v811, 0.0
        %v830 = vsel %vm520, %v812, 0.0
        %v831 = vpack.c.bf16 %v813, %v813
        %v832 = vpack.c.bf16 %v814, %v814
        %v833 = vpack.c.bf16 %v815, %v815
        %v834 = vpack.c.bf16 %v816, %v816
        %v835 = vpack.c.bf16 %v817, %v817
        %v836 = vpack.c.bf16 %v818, %v818
        %v837 = vpack.c.bf16 %v819, %v819
        %v838 = vpack.c.bf16 %v820, %v820
        %v839 = vpack.c.bf16 %v821, %v821
        %v840 = vpack.c.bf16 %v822, %v822
        %v841 = vpack.c.bf16 %v823, %v823
        %v842 = vpack.c.bf16 %v824, %v824
        %v843 = vpack.c.bf16 %v825, %v825
        %v844 = vpack.c.bf16 %v826, %v826
        %v845 = vpack.c.bf16 %v827, %v827
        %v846 = vpack.c.bf16 %v828, %v828
        %v847 = vpack.c.bf16 %v829, %v829
        %v848 = vpack.c.bf16 %v830, %v830
        %s849 = scalar_lea.vmem [#allocation2], 216
        %850 = vst [vmem:[%s849] sm:$0xf] %v831
        %v851 = vld [vmem:[%s849 + $0x4] sm:$0x1]
        %v852 = vsel %vm401, %v832, %v851
        %853 = vst [vmem:[%s849 + $0x4] sm:$0x1] %v852
        %854 = vst [vmem:[%s849 + $0x8] sm:$0xf] %v833
        %v855 = vld [vmem:[%s849 + $0xc] sm:$0x1]
        %v856 = vsel %vm401, %v834, %v855
        %857 = vst [vmem:[%s849 + $0xc] sm:$0x1] %v856
        %858 = vst [vmem:[%s849 + $0x10] sm:$0xf] %v835
        %v859 = vld [vmem:[%s849 + $0x14] sm:$0x1]
        %v860 = vsel %vm401, %v836, %v859
        %861 = vst [vmem:[%s849 + $0x14] sm:$0x1] %v860
        %862 = vst [vmem:[%s849 + $0x18] sm:$0xf] %v837
        %v863 = vld [vmem:[%s849 + $0x1c] sm:$0x1]
        %v864 = vsel %vm401, %v838, %v863
        %865 = vst [vmem:[%s849 + $0x1c] sm:$0x1] %v864
        %866 = vst [vmem:[%s849 + $0x20] sm:$0xf] %v839
        %v867 = vld [vmem:[%s849 + $0x24] sm:$0x1]
        %v868 = vsel %vm401, %v840, %v867
        %869 = vst [vmem:[%s849 + $0x24] sm:$0x1] %v868
        %870 = vst [vmem:[%s849 + $0x28] sm:$0xf] %v841
        %v871 = vld [vmem:[%s849 + $0x2c] sm:$0x1]
        %v872 = vsel %vm401, %v842, %v871
        %873 = vst [vmem:[%s849 + $0x2c] sm:$0x1] %v872
        %874 = vst [vmem:[%s849 + $0x30] sm:$0xf] %v843
        %v875 = vld [vmem:[%s849 + $0x34] sm:$0x1]
        %v876 = vsel %vm401, %v844, %v875
        %877 = vst [vmem:[%s849 + $0x34] sm:$0x1] %v876
        %878 = vst [vmem:[%s849 + $0x38] sm:$0xf] %v845
        %v879 = vld [vmem:[%s849 + $0x3c] sm:$0x1]
        %v880 = vsel %vm401, %v846, %v879
        %881 = vst [vmem:[%s849 + $0x3c] sm:$0x1] %v880
        %882 = vst [vmem:[%s849 + $0x40] sm:$0xf] %v847
        %v883 = vld [vmem:[%s849 + $0x44] sm:$0x1]
        %v884 = vsel %vm401, %v848, %v883
        %885 = vst [vmem:[%s849 + $0x44] sm:$0x1] %v884
        %s886 = smul.u32 %s25, 8
        %s887 = smul.u32 %s886, 2
        %s888 = smul.addr %s887, 4
        %s889 = scalar_lea.vmem [#allocation2], %s888
        %v890 = vld [vmem:[%s889] sm:$0xf]
        %v891 = vld [vmem:[%s889 + $0x8] sm:$0xf]
        %v892 = vld [vmem:[%s889 + $0x10] sm:$0xf]
        %v893 = vld [vmem:[%s889 + $0x18] sm:$0xf]
        %v894 = vld [vmem:[%s889 + $0x20] sm:$0xf]
        %v895 = vld [vmem:[%s889 + $0x28] sm:$0xf]
        %v896 = vld [vmem:[%s889 + $0x30] sm:$0xf]
        %v897 = vld [vmem:[%s889 + $0x38] sm:$0xf]
        %v898 = vld [vmem:[%s1] sm:$0xf]
        %v899 = vld [vmem:[%s1 + $0x4] sm:$0xf]
        %v900 = vld [vmem:[%s1 + $0x8] sm:$0xf]
        %v901 = vld [vmem:[%s1 + $0xc] sm:$0xf]
        %v902 = vld [vmem:[%s1 + $0x10] sm:$0xf]
        %v903 = vld [vmem:[%s1 + $0x14] sm:$0xf]
        %v904 = vld [vmem:[%s1 + $0x18] sm:$0xf]
        %v905 = vld [vmem:[%s1 + $0x1c] sm:$0xf]
        %v906 = vld [vmem:[%s1 + $0x20] sm:$0xf]
        %v907 = vld [vmem:[%s1 + $0x24] sm:$0xf]
        %v908 = vld [vmem:[%s1 + $0x28] sm:$0xf]
        %v909 = vld [vmem:[%s1 + $0x2c] sm:$0xf]
        %v910 = vld [vmem:[%s1 + $0x30] sm:$0xf]
        %v911 = vld [vmem:[%s1 + $0x34] sm:$0xf]
        %v912 = vld [vmem:[%s1 + $0x38] sm:$0xf]
        %v913 = vld [vmem:[%s1 + $0x3c] sm:$0xf]
        %s914 = sadd.s32 %s887, 18
        %s915 = smul.addr %s914, 4
        %s916 = scalar_lea.vmem [#allocation2], %s915
        %v917 = vld [vmem:[%s916] sm:$0xf]
        %v918 = vld [vmem:[%s916 + $0x8] sm:$0xf]
        %v919 = vld [vmem:[%s916 + $0x10] sm:$0xf]
        %v920 = vld [vmem:[%s916 + $0x18] sm:$0xf]
        %v921 = vld [vmem:[%s916 + $0x20] sm:$0xf]
        %v922 = vld [vmem:[%s916 + $0x28] sm:$0xf]
        %v923 = vld [vmem:[%s916 + $0x30] sm:$0xf]
        %v924 = vld [vmem:[%s916 + $0x38] sm:$0xf]
        %s925 = scalar_lea.vmem %s1, 64
        %v926 = vld [vmem:[%s925] sm:$0xf]
        %v927 = vld [vmem:[%s925 + $0x4] sm:$0xf]
        %v928 = vld [vmem:[%s925 + $0x8] sm:$0xf]
        %v929 = vld [vmem:[%s925 + $0xc] sm:$0xf]
        %v930 = vld [vmem:[%s925 + $0x10] sm:$0xf]
        %v931 = vld [vmem:[%s925 + $0x14] sm:$0xf]
        %v932 = vld [vmem:[%s925 + $0x18] sm:$0xf]
        %v933 = vld [vmem:[%s925 + $0x1c] sm:$0xf]
        %v934 = vld [vmem:[%s925 + $0x20] sm:$0xf]
        %v935 = vld [vmem:[%s925 + $0x24] sm:$0xf]
        %v936 = vld [vmem:[%s925 + $0x28] sm:$0xf]
        %v937 = vld [vmem:[%s925 + $0x2c] sm:$0xf]
        %v938 = vld [vmem:[%s925 + $0x30] sm:$0xf]
        %v939 = vld [vmem:[%s925 + $0x34] sm:$0xf]
        %v940 = vld [vmem:[%s925 + $0x38] sm:$0xf]
        %v941 = vld [vmem:[%s925 + $0x3c] sm:$0xf]
        %v950 = vunpack.c.l.b16 %v917
        %v951 = vunpack.c.l.b16 %v918
        %v952 = vunpack.c.l.b16 %v919
        %v953 = vunpack.c.l.b16 %v920
        %v954 = vunpack.c.l.b16 %v921
        %v955 = vunpack.c.l.b16 %v922
        %v956 = vunpack.c.l.b16 %v923
        %v957 = vunpack.c.l.b16 %v924
        %v958 = vpack.c.b16 %v951, %v950
        %v959 = vpack.c.b16 %v953, %v952
        %v960 = vpack.c.b16 %v955, %v954
        %v961 = vpack.c.b16 %v957, %v956
        %v982 = vunpack.c.l.b16 %v926
        %v983 = vunpack.c.l.b16 %v927
        %v984 = vunpack.c.l.b16 %v928
        %v985 = vunpack.c.l.b16 %v929
        %v986 = vunpack.c.l.b16 %v930
        %v987 = vunpack.c.l.b16 %v931
        %v988 = vunpack.c.l.b16 %v932
        %v989 = vunpack.c.l.b16 %v933
        %v990 = vunpack.c.l.b16 %v934
        %v991 = vunpack.c.l.b16 %v935
        %v992 = vunpack.c.l.b16 %v936
        %v993 = vunpack.c.l.b16 %v937
        %v994 = vunpack.c.l.b16 %v938
        %v995 = vunpack.c.l.b16 %v939
        %v996 = vunpack.c.l.b16 %v940
        %v997 = vunpack.c.l.b16 %v941
        %v998 = vpack.c.b16 %v983, %v982
        %v999 = vpack.c.b16 %v985, %v984
        %v1000 = vpack.c.b16 %v987, %v986
        %v1001 = vpack.c.b16 %v989, %v988
        %v1002 = vpack.c.b16 %v991, %v990
        %v1003 = vpack.c.b16 %v993, %v992
        %v1004 = vpack.c.b16 %v995, %v994
        %v1005 = vpack.c.b16 %v997, %v996
        %1014 = vmatpush.bf16.msra.mxu0 %v1005
        %1015 = vmatpush.bf16.msra.mxu0 %v1004
        %1016 = vmatpush.bf16.msra.mxu0 %v1003
        %1017 = vmatpush.bf16.msra.mxu0 %v1002
        %1018 = vmatpush.bf16.msra.mxu0 %v1001
        %1019 = vmatpush.bf16.msra.mxu0 %v1000
        %1020 = vmatpush.bf16.msra.mxu0 %v999
        %1021 = vmatpush.bf16.msra.mxu0 %v998
        %1022 = vmatmul.bf16.gmra.mxu0 %v958
        %v1023 = vpop.f32.mrf.mxu0
        %v1024 = vadd.f32 0.0, %v1023
        %v1025 = vpop.f32.mrf.mxu0
        %v1026 = vadd.f32 0.0, %v1025
        %1027 = vmatmul.bf16.gmra.mxu0 %v959
        %v1028 = vpop.f32.mrf.mxu0
        %v1029 = vadd.f32 0.0, %v1028
        %v1030 = vpop.f32.mrf.mxu0
        %v1031 = vadd.f32 0.0, %v1030
        %1032 = vmatmul.bf16.gmra.mxu0 %v960
        %v1033 = vpop.f32.mrf.mxu0
        %v1034 = vadd.f32 0.0, %v1033
        %v1035 = vpop.f32.mrf.mxu0
        %v1036 = vadd.f32 0.0, %v1035
        %1037 = vmatmul.bf16.gmra.mxu0 %v961
        %v1038 = vpop.f32.mrf.mxu0
        %v1039 = vadd.f32 0.0, %v1038
        %v1040 = vpop.f32.mrf.mxu0
        %v1041 = vadd.f32 0.0, %v1040
        %1042 = vdwg.mxu0
        %v1051 = vunpack.c.l.b16 %v890
        %v1052 = vunpack.c.l.b16 %v891
        %v1053 = vunpack.c.l.b16 %v892
        %v1054 = vunpack.c.l.b16 %v893
        %v1055 = vunpack.c.l.b16 %v894
        %v1056 = vunpack.c.l.b16 %v895
        %v1057 = vunpack.c.l.b16 %v896
        %v1058 = vunpack.c.l.b16 %v897
        %v1059 = vpack.c.b16 %v1052, %v1051
        %v1060 = vpack.c.b16 %v1054, %v1053
        %v1061 = vpack.c.b16 %v1056, %v1055
        %v1062 = vpack.c.b16 %v1058, %v1057
        %v1083 = vunpack.c.l.b16 %v898
        %v1084 = vunpack.c.l.b16 %v899
        %v1085 = vunpack.c.l.b16 %v900
        %v1086 = vunpack.c.l.b16 %v901
        %v1087 = vunpack.c.l.b16 %v902
        %v1088 = vunpack.c.l.b16 %v903
        %v1089 = vunpack.c.l.b16 %v904
        %v1090 = vunpack.c.l.b16 %v905
        %v1091 = vunpack.c.l.b16 %v906
        %v1092 = vunpack.c.l.b16 %v907
        %v1093 = vunpack.c.l.b16 %v908
        %v1094 = vunpack.c.l.b16 %v909
        %v1095 = vunpack.c.l.b16 %v910
        %v1096 = vunpack.c.l.b16 %v911
        %v1097 = vunpack.c.l.b16 %v912
        %v1098 = vunpack.c.l.b16 %v913
        %v1099 = vpack.c.b16 %v1084, %v1083
        %v1100 = vpack.c.b16 %v1086, %v1085
        %v1101 = vpack.c.b16 %v1088, %v1087
        %v1102 = vpack.c.b16 %v1090, %v1089
        %v1103 = vpack.c.b16 %v1092, %v1091
        %v1104 = vpack.c.b16 %v1094, %v1093
        %v1105 = vpack.c.b16 %v1096, %v1095
        %v1106 = vpack.c.b16 %v1098, %v1097
        %1115 = vmatpush.bf16.msra.mxu0 %v1106
        %1116 = vmatpush.bf16.msra.mxu0 %v1105
        %1117 = vmatpush.bf16.msra.mxu0 %v1104
        %1118 = vmatpush.bf16.msra.mxu0 %v1103
        %1119 = vmatpush.bf16.msra.mxu0 %v1102
        %1120 = vmatpush.bf16.msra.mxu0 %v1101
        %1121 = vmatpush.bf16.msra.mxu0 %v1100
        %1122 = vmatpush.bf16.msra.mxu0 %v1099
        %1123 = vmatmul.bf16.gmra.mxu0 %v1059
        %v1124 = vpop.f32.mrf.mxu0
        %v1125 = vadd.f32 %v1024, %v1124
        %v1126 = vpop.f32.mrf.mxu0
        %v1127 = vadd.f32 %v1026, %v1126
        %1128 = vmatmul.bf16.gmra.mxu0 %v1060
        %v1129 = vpop.f32.mrf.mxu0
        %v1130 = vadd.f32 %v1029, %v1129
        %v1131 = vpop.f32.mrf.mxu0
        %v1132 = vadd.f32 %v1031, %v1131
        %1133 = vmatmul.bf16.gmra.mxu0 %v1061
        %v1134 = vpop.f32.mrf.mxu0
        %v1135 = vadd.f32 %v1034, %v1134
        %v1136 = vpop.f32.mrf.mxu0
        %v1137 = vadd.f32 %v1036, %v1136
        %1138 = vmatmul.bf16.gmra.mxu0 %v1062
        %v1139 = vpop.f32.mrf.mxu0
        %v1140 = vadd.f32 %v1039, %v1139
        %v1141 = vpop.f32.mrf.mxu0
        %v1142 = vadd.f32 %v1041, %v1141
        %1143 = vdwg.mxu0
        %v1144 = vld [vmem:[%s889] sm:$0xf]
        %v1145 = vld [vmem:[%s889 + $0x4] sm:$0x1]
        %v1146 = vld [vmem:[%s889 + $0x8] sm:$0xf]
        %v1147 = vld [vmem:[%s889 + $0xc] sm:$0x1]
        %v1148 = vld [vmem:[%s889 + $0x10] sm:$0xf]
        %v1149 = vld [vmem:[%s889 + $0x14] sm:$0x1]
        %v1150 = vld [vmem:[%s889 + $0x18] sm:$0xf]
        %v1151 = vld [vmem:[%s889 + $0x1c] sm:$0x1]
        %v1152 = vld [vmem:[%s889 + $0x20] sm:$0xf]
        %v1153 = vld [vmem:[%s889 + $0x24] sm:$0x1]
        %v1154 = vld [vmem:[%s889 + $0x28] sm:$0xf]
        %v1155 = vld [vmem:[%s889 + $0x2c] sm:$0x1]
        %v1156 = vld [vmem:[%s889 + $0x30] sm:$0xf]
        %v1157 = vld [vmem:[%s889 + $0x34] sm:$0x1]
        %v1158 = vld [vmem:[%s889 + $0x38] sm:$0xf]
        %v1159 = vld [vmem:[%s889 + $0x3c] sm:$0x1]
        %vm1160 = vsmask.f32 3328
        %vm1161 = vsmask.f32 7440
        %vm1162 = vmor %vm1160, %vm1161
        %v1164 = vshrl.u32 %v1144, 16
        %v1166 = vrot.slane %v1164, 4
        %v1167 = vshll.u32 %v1144, 16
        %v1169 = vrot.slane %v1167, 5
        %v1170 = vor.u32 %v1166, %v1169
        %v1171 = vrot.slane %v1170, 4
        %v1173 = vshll.u32 %v1145, 16
        %v1175 = vrot.slane %v1173, 5
        %v1176 = vsel %vm1162, %v1171, %v1175
        %v1178 = vshrl.u32 %v1146, 16
        %v1180 = vrot.slane %v1178, 4
        %v1181 = vshll.u32 %v1146, 16
        %v1183 = vrot.slane %v1181, 5
        %v1184 = vor.u32 %v1180, %v1183
        %v1185 = vrot.slane %v1184, 4
        %v1187 = vshll.u32 %v1147, 16
        %v1189 = vrot.slane %v1187, 5
        %v1190 = vsel %vm1162, %v1185, %v1189
        %v1192 = vshrl.u32 %v1148, 16
        %v1194 = vrot.slane %v1192, 4
        %v1195 = vshll.u32 %v1148, 16
        %v1197 = vrot.slane %v1195, 5
        %v1198 = vor.u32 %v1194, %v1197
        %v1199 = vrot.slane %v1198, 4
        %v1201 = vshll.u32 %v1149, 16
        %v1203 = vrot.slane %v1201, 5
        %v1204 = vsel %vm1162, %v1199, %v1203
        %v1206 = vshrl.u32 %v1150, 16
        %v1208 = vrot.slane %v1206, 4
        %v1209 = vshll.u32 %v1150, 16
        %v1211 = vrot.slane %v1209, 5
        %v1212 = vor.u32 %v1208, %v1211
        %v1213 = vrot.slane %v1212, 4
        %v1215 = vshll.u32 %v1151, 16
        %v1217 = vrot.slane %v1215, 5
        %v1218 = vsel %vm1162, %v1213, %v1217
        %v1220 = vshrl.u32 %v1152, 16
        %v1222 = vrot.slane %v1220, 4
        %v1223 = vshll.u32 %v1152, 16
        %v1225 = vrot.slane %v1223, 5
        %v1226 = vor.u32 %v1222, %v1225
        %v1227 = vrot.slane %v1226, 4
        %v1229 = vshll.u32 %v1153, 16
        %v1231 = vrot.slane %v1229, 5
        %v1232 = vsel %vm1162, %v1227, %v1231
        %v1234 = vshrl.u32 %v1154, 16
        %v1236 = vrot.slane %v1234, 4
        %v1237 = vshll.u32 %v1154, 16
        %v1239 = vrot.slane %v1237, 5
        %v1240 = vor.u32 %v1236, %v1239
        %v1241 = vrot.slane %v1240, 4
        %v1243 = vshll.u32 %v1155, 16
        %v1245 = vrot.slane %v1243, 5
        %v1246 = vsel %vm1162, %v1241, %v1245
        %v1248 = vshrl.u32 %v1156, 16
        %v1250 = vrot.slane %v1248, 4
        %v1251 = vshll.u32 %v1156, 16
        %v1253 = vrot.slane %v1251, 5
        %v1254 = vor.u32 %v1250, %v1253
        %v1255 = vrot.slane %v1254, 4
        %v1257 = vshll.u32 %v1157, 16
        %v1259 = vrot.slane %v1257, 5
        %v1260 = vsel %vm1162, %v1255, %v1259
        %v1262 = vshrl.u32 %v1158, 16
        %v1264 = vrot.slane %v1262, 4
        %v1265 = vshll.u32 %v1158, 16
        %v1267 = vrot.slane %v1265, 5
        %v1268 = vor.u32 %v1264, %v1267
        %v1269 = vrot.slane %v1268, 4
        %v1271 = vshll.u32 %v1159, 16
        %v1273 = vrot.slane %v1271, 5
        %v1274 = vsel %vm1162, %v1269, %v1273
        %s1275 = scalar_lea.vmem %s1, 128
        %v1276 = vld [vmem:[%s1275] sm:$0xf]
        %v1277 = vld [vmem:[%s1275 + $0x4] sm:$0xf]
        %v1278 = vld [vmem:[%s1275 + $0x8] sm:$0xf]
        %v1279 = vld [vmem:[%s1275 + $0xc] sm:$0xf]
        %v1280 = vld [vmem:[%s1275 + $0x10] sm:$0xf]
        %v1281 = vld [vmem:[%s1275 + $0x14] sm:$0xf]
        %v1282 = vld [vmem:[%s1275 + $0x18] sm:$0xf]
        %v1283 = vld [vmem:[%s1275 + $0x1c] sm:$0xf]
        %v1284 = vld [vmem:[%s1275 + $0x20] sm:$0xf]
        %v1285 = vld [vmem:[%s1275 + $0x24] sm:$0xf]
        %v1286 = vld [vmem:[%s1275 + $0x28] sm:$0xf]
        %v1287 = vld [vmem:[%s1275 + $0x2c] sm:$0xf]
        %v1288 = vld [vmem:[%s1275 + $0x30] sm:$0xf]
        %v1289 = vld [vmem:[%s1275 + $0x34] sm:$0xf]
        %v1290 = vld [vmem:[%s1275 + $0x38] sm:$0xf]
        %v1291 = vld [vmem:[%s1275 + $0x3c] sm:$0xf]
        %v1292 = vunpack.c.l.b16 %v1176
        %v1293 = vunpack.c.l.b16 %v1190
        %v1294 = vunpack.c.l.b16 %v1204
        %v1295 = vunpack.c.l.b16 %v1218
        %v1296 = vunpack.c.l.b16 %v1232
        %v1297 = vunpack.c.l.b16 %v1246
        %v1298 = vunpack.c.l.b16 %v1260
        %v1299 = vunpack.c.l.b16 %v1274
        %v1300 = vpack.c.b16 %v1293, %v1292
        %v1301 = vpack.c.b16 %v1295, %v1294
        %v1302 = vpack.c.b16 %v1297, %v1296
        %v1303 = vpack.c.b16 %v1299, %v1298
        %v1324 = vunpack.c.l.b16 %v1276
        %v1325 = vunpack.c.l.b16 %v1277
        %v1326 = vunpack.c.l.b16 %v1278
        %v1327 = vunpack.c.l.b16 %v1279
        %v1328 = vunpack.c.l.b16 %v1280
        %v1329 = vunpack.c.l.b16 %v1281
        %v1330 = vunpack.c.l.b16 %v1282
        %v1331 = vunpack.c.l.b16 %v1283
        %v1332 = vunpack.c.l.b16 %v1284
        %v1333 = vunpack.c.l.b16 %v1285
        %v1334 = vunpack.c.l.b16 %v1286
        %v1335 = vunpack.c.l.b16 %v1287
        %v1336 = vunpack.c.l.b16 %v1288
        %v1337 = vunpack.c.l.b16 %v1289
        %v1338 = vunpack.c.l.b16 %v1290
        %v1339 = vunpack.c.l.b16 %v1291
        %v1340 = vpack.c.b16 %v1325, %v1324
        %v1341 = vpack.c.b16 %v1327, %v1326
        %v1342 = vpack.c.b16 %v1329, %v1328
        %v1343 = vpack.c.b16 %v1331, %v1330
        %v1344 = vpack.c.b16 %v1333, %v1332
        %v1345 = vpack.c.b16 %v1335, %v1334
        %v1346 = vpack.c.b16 %v1337, %v1336
        %v1347 = vpack.c.b16 %v1339, %v1338
        %1356 = vmatpush.bf16.msra.mxu0 %v1347
        %1357 = vmatpush.bf16.msra.mxu0 %v1346
        %1358 = vmatpush.bf16.msra.mxu0 %v1345
        %1359 = vmatpush.bf16.msra.mxu0 %v1344
        %1360 = vmatpush.bf16.msra.mxu0 %v1343
        %1361 = vmatpush.bf16.msra.mxu0 %v1342
        %1362 = vmatpush.bf16.msra.mxu0 %v1341
        %1363 = vmatpush.bf16.msra.mxu0 %v1340
        %1364 = vmatmul.bf16.gmra.mxu0 %v1300
        %v1365 = vpop.f32.mrf.mxu0
        %v1366 = vadd.f32 0.0, %v1365
        %v1367 = vpop.f32.mrf.mxu0
        %v1368 = vadd.f32 0.0, %v1367
        %1369 = vmatmul.bf16.gmra.mxu0 %v1301
        %v1370 = vpop.f32.mrf.mxu0
        %v1371 = vadd.f32 0.0, %v1370
        %v1372 = vpop.f32.mrf.mxu0
        %v1373 = vadd.f32 0.0, %v1372
        %1374 = vmatmul.bf16.gmra.mxu0 %v1302
        %v1375 = vpop.f32.mrf.mxu0
        %v1376 = vadd.f32 0.0, %v1375
        %v1377 = vpop.f32.mrf.mxu0
        %v1378 = vadd.f32 0.0, %v1377
        %1379 = vmatmul.bf16.gmra.mxu0 %v1303
        %v1380 = vpop.f32.mrf.mxu0
        %v1381 = vadd.f32 0.0, %v1380
        %v1382 = vpop.f32.mrf.mxu0
        %v1383 = vadd.f32 0.0, %v1382
        %1384 = vdwg.mxu0
        %v1385 = vadd.f32 %v1125, %v1366
        %v1386 = vadd.f32 %v1127, %v1368
        %v1387 = vadd.f32 %v1130, %v1371
        %v1388 = vadd.f32 %v1132, %v1373
        %v1389 = vadd.f32 %v1135, %v1376
        %v1390 = vadd.f32 %v1137, %v1378
        %v1391 = vadd.f32 %v1140, %v1381
        %v1392 = vadd.f32 %v1142, %v1383
        %s1393 = sadd.s32 %s887, 36
        %s1394 = smul.addr %s1393, 4
        %s1395 = scalar_lea.vmem [#allocation2], %s1394
        %v1396 = vld [vmem:[%s1395] sm:$0xf]
        %v1397 = vld [vmem:[%s1395 + $0x8] sm:$0xf]
        %v1398 = vld [vmem:[%s1395 + $0x10] sm:$0xf]
        %v1399 = vld [vmem:[%s1395 + $0x18] sm:$0xf]
        %v1400 = vld [vmem:[%s1395 + $0x20] sm:$0xf]
        %v1401 = vld [vmem:[%s1395 + $0x28] sm:$0xf]
        %v1402 = vld [vmem:[%s1395 + $0x30] sm:$0xf]
        %v1403 = vld [vmem:[%s1395 + $0x38] sm:$0xf]
        %s1404 = scalar_lea.vmem %s1, 192
        %v1405 = vld [vmem:[%s1404] sm:$0xf]
        %v1406 = vld [vmem:[%s1404 + $0x4] sm:$0xf]
        %v1407 = vld [vmem:[%s1404 + $0x8] sm:$0xf]
        %v1408 = vld [vmem:[%s1404 + $0xc] sm:$0xf]
        %v1409 = vld [vmem:[%s1404 + $0x10] sm:$0xf]
        %v1410 = vld [vmem:[%s1404 + $0x14] sm:$0xf]
        %v1411 = vld [vmem:[%s1404 + $0x18] sm:$0xf]
        %v1412 = vld [vmem:[%s1404 + $0x1c] sm:$0xf]
        %v1413 = vld [vmem:[%s1404 + $0x20] sm:$0xf]
        %v1414 = vld [vmem:[%s1404 + $0x24] sm:$0xf]
        %v1415 = vld [vmem:[%s1404 + $0x28] sm:$0xf]
        %v1416 = vld [vmem:[%s1404 + $0x2c] sm:$0xf]
        %v1417 = vld [vmem:[%s1404 + $0x30] sm:$0xf]
        %v1418 = vld [vmem:[%s1404 + $0x34] sm:$0xf]
        %v1419 = vld [vmem:[%s1404 + $0x38] sm:$0xf]
        %v1420 = vld [vmem:[%s1404 + $0x3c] sm:$0xf]
        %v1429 = vunpack.c.l.b16 %v1396
        %v1430 = vunpack.c.l.b16 %v1397
        %v1431 = vunpack.c.l.b16 %v1398
        %v1432 = vunpack.c.l.b16 %v1399
        %v1433 = vunpack.c.l.b16 %v1400
        %v1434 = vunpack.c.l.b16 %v1401
        %v1435 = vunpack.c.l.b16 %v1402
        %v1436 = vunpack.c.l.b16 %v1403
        %v1437 = vpack.c.b16 %v1430, %v1429
        %v1438 = vpack.c.b16 %v1432, %v1431
        %v1439 = vpack.c.b16 %v1434, %v1433
        %v1440 = vpack.c.b16 %v1436, %v1435
        %v1461 = vunpack.c.l.b16 %v1405
        %v1462 = vunpack.c.l.b16 %v1406
        %v1463 = vunpack.c.l.b16 %v1407
        %v1464 = vunpack.c.l.b16 %v1408
        %v1465 = vunpack.c.l.b16 %v1409
        %v1466 = vunpack.c.l.b16 %v1410
        %v1467 = vunpack.c.l.b16 %v1411
        %v1468 = vunpack.c.l.b16 %v1412
        %v1469 = vunpack.c.l.b16 %v1413
        %v1470 = vunpack.c.l.b16 %v1414
        %v1471 = vunpack.c.l.b16 %v1415
        %v1472 = vunpack.c.l.b16 %v1416
        %v1473 = vunpack.c.l.b16 %v1417
        %v1474 = vunpack.c.l.b16 %v1418
        %v1475 = vunpack.c.l.b16 %v1419
        %v1476 = vunpack.c.l.b16 %v1420
        %v1477 = vpack.c.b16 %v1462, %v1461
        %v1478 = vpack.c.b16 %v1464, %v1463
        %v1479 = vpack.c.b16 %v1466, %v1465
        %v1480 = vpack.c.b16 %v1468, %v1467
        %v1481 = vpack.c.b16 %v1470, %v1469
        %v1482 = vpack.c.b16 %v1472, %v1471
        %v1483 = vpack.c.b16 %v1474, %v1473
        %v1484 = vpack.c.b16 %v1476, %v1475
        %1493 = vmatpush.bf16.msra.mxu0 %v1484
        %1494 = vmatpush.bf16.msra.mxu0 %v1483
        %1495 = vmatpush.bf16.msra.mxu0 %v1482
        %1496 = vmatpush.bf16.msra.mxu0 %v1481
        %1497 = vmatpush.bf16.msra.mxu0 %v1480
        %1498 = vmatpush.bf16.msra.mxu0 %v1479
        %1499 = vmatpush.bf16.msra.mxu0 %v1478
        %1500 = vmatpush.bf16.msra.mxu0 %v1477
        %1501 = vmatmul.bf16.gmra.mxu0 %v1437
        %v1502 = vpop.f32.mrf.mxu0
        %v1503 = vadd.f32 0.0, %v1502
        %v1504 = vpop.f32.mrf.mxu0
        %v1505 = vadd.f32 0.0, %v1504
        %1506 = vmatmul.bf16.gmra.mxu0 %v1438
        %v1507 = vpop.f32.mrf.mxu0
        %v1508 = vadd.f32 0.0, %v1507
        %v1509 = vpop.f32.mrf.mxu0
        %v1510 = vadd.f32 0.0, %v1509
        %1511 = vmatmul.bf16.gmra.mxu0 %v1439
        %v1512 = vpop.f32.mrf.mxu0
        %v1513 = vadd.f32 0.0, %v1512
        %v1514 = vpop.f32.mrf.mxu0
        %v1515 = vadd.f32 0.0, %v1514
        %1516 = vmatmul.bf16.gmra.mxu0 %v1440
        %v1517 = vpop.f32.mrf.mxu0
        %v1518 = vadd.f32 0.0, %v1517
        %v1519 = vpop.f32.mrf.mxu0
        %v1520 = vadd.f32 0.0, %v1519
        %1521 = vdwg.mxu0
        %v1522 = vadd.f32 %v1385, %v1503
        %v1523 = vadd.f32 %v1386, %v1505
        %v1524 = vadd.f32 %v1387, %v1508
        %v1525 = vadd.f32 %v1388, %v1510
        %v1526 = vadd.f32 %v1389, %v1513
        %v1527 = vadd.f32 %v1390, %v1515
        %v1528 = vadd.f32 %v1391, %v1518
        %v1529 = vadd.f32 %v1392, %v1520
        %s1530 = sadd.s32 %s887, 54
        %s1531 = smul.addr %s1530, 4
        %s1532 = scalar_lea.vmem [#allocation2], %s1531
        %v1533 = vld [vmem:[%s1532] sm:$0xf]
        %v1534 = vld [vmem:[%s1532 + $0x8] sm:$0xf]
        %v1535 = vld [vmem:[%s1532 + $0x10] sm:$0xf]
        %v1536 = vld [vmem:[%s1532 + $0x18] sm:$0xf]
        %v1537 = vld [vmem:[%s1532 + $0x20] sm:$0xf]
        %v1538 = vld [vmem:[%s1532 + $0x28] sm:$0xf]
        %v1539 = vld [vmem:[%s1532 + $0x30] sm:$0xf]
        %v1540 = vld [vmem:[%s1532 + $0x38] sm:$0xf]
        %s1541 = scalar_lea.vmem %s1, 256
        %v1542 = vld [vmem:[%s1541] sm:$0xf]
        %v1543 = vld [vmem:[%s1541 + $0x4] sm:$0xf]
        %v1544 = vld [vmem:[%s1541 + $0x8] sm:$0xf]
        %v1545 = vld [vmem:[%s1541 + $0xc] sm:$0xf]
        %v1546 = vld [vmem:[%s1541 + $0x10] sm:$0xf]
        %v1547 = vld [vmem:[%s1541 + $0x14] sm:$0xf]
        %v1548 = vld [vmem:[%s1541 + $0x18] sm:$0xf]
        %v1549 = vld [vmem:[%s1541 + $0x1c] sm:$0xf]
        %v1550 = vld [vmem:[%s1541 + $0x20] sm:$0xf]
        %v1551 = vld [vmem:[%s1541 + $0x24] sm:$0xf]
        %v1552 = vld [vmem:[%s1541 + $0x28] sm:$0xf]
        %v1553 = vld [vmem:[%s1541 + $0x2c] sm:$0xf]
        %v1554 = vld [vmem:[%s1541 + $0x30] sm:$0xf]
        %v1555 = vld [vmem:[%s1541 + $0x34] sm:$0xf]
        %v1556 = vld [vmem:[%s1541 + $0x38] sm:$0xf]
        %v1557 = vld [vmem:[%s1541 + $0x3c] sm:$0xf]
        %v1566 = vunpack.c.l.b16 %v1533
        %v1567 = vunpack.c.l.b16 %v1534
        %v1568 = vunpack.c.l.b16 %v1535
        %v1569 = vunpack.c.l.b16 %v1536
        %v1570 = vunpack.c.l.b16 %v1537
        %v1571 = vunpack.c.l.b16 %v1538
        %v1572 = vunpack.c.l.b16 %v1539
        %v1573 = vunpack.c.l.b16 %v1540
        %v1574 = vpack.c.b16 %v1567, %v1566
        %v1575 = vpack.c.b16 %v1569, %v1568
        %v1576 = vpack.c.b16 %v1571, %v1570
        %v1577 = vpack.c.b16 %v1573, %v1572
        %v1598 = vunpack.c.l.b16 %v1542
        %v1599 = vunpack.c.l.b16 %v1543
        %v1600 = vunpack.c.l.b16 %v1544
        %v1601 = vunpack.c.l.b16 %v1545
        %v1602 = vunpack.c.l.b16 %v1546
        %v1603 = vunpack.c.l.b16 %v1547
        %v1604 = vunpack.c.l.b16 %v1548
        %v1605 = vunpack.c.l.b16 %v1549
        %v1606 = vunpack.c.l.b16 %v1550
        %v1607 = vunpack.c.l.b16 %v1551
        %v1608 = vunpack.c.l.b16 %v1552
        %v1609 = vunpack.c.l.b16 %v1553
        %v1610 = vunpack.c.l.b16 %v1554
        %v1611 = vunpack.c.l.b16 %v1555
        %v1612 = vunpack.c.l.b16 %v1556
        %v1613 = vunpack.c.l.b16 %v1557
        %v1614 = vpack.c.b16 %v1599, %v1598
        %v1615 = vpack.c.b16 %v1601, %v1600
        %v1616 = vpack.c.b16 %v1603, %v1602
        %v1617 = vpack.c.b16 %v1605, %v1604
        %v1618 = vpack.c.b16 %v1607, %v1606
        %v1619 = vpack.c.b16 %v1609, %v1608
        %v1620 = vpack.c.b16 %v1611, %v1610
        %v1621 = vpack.c.b16 %v1613, %v1612
        %1630 = vmatpush.bf16.msra.mxu0 %v1621
        %1631 = vmatpush.bf16.msra.mxu0 %v1620
        %1632 = vmatpush.bf16.msra.mxu0 %v1619
        %1633 = vmatpush.bf16.msra.mxu0 %v1618
        %1634 = vmatpush.bf16.msra.mxu0 %v1617
        %1635 = vmatpush.bf16.msra.mxu0 %v1616
        %1636 = vmatpush.bf16.msra.mxu0 %v1615
        %1637 = vmatpush.bf16.msra.mxu0 %v1614
        %1638 = vmatmul.bf16.gmra.mxu0 %v1574
        %v1639 = vpop.f32.mrf.mxu0
        %v1640 = vadd.f32 0.0, %v1639
        %v1641 = vpop.f32.mrf.mxu0
        %v1642 = vadd.f32 0.0, %v1641
        %1643 = vmatmul.bf16.gmra.mxu0 %v1575
        %v1644 = vpop.f32.mrf.mxu0
        %v1645 = vadd.f32 0.0, %v1644
        %v1646 = vpop.f32.mrf.mxu0
        %v1647 = vadd.f32 0.0, %v1646
        %1648 = vmatmul.bf16.gmra.mxu0 %v1576
        %v1649 = vpop.f32.mrf.mxu0
        %v1650 = vadd.f32 0.0, %v1649
        %v1651 = vpop.f32.mrf.mxu0
        %v1652 = vadd.f32 0.0, %v1651
        %1653 = vmatmul.bf16.gmra.mxu0 %v1577
        %v1654 = vpop.f32.mrf.mxu0
        %v1655 = vadd.f32 0.0, %v1654
        %v1656 = vpop.f32.mrf.mxu0
        %v1657 = vadd.f32 0.0, %v1656
        %1658 = vdwg.mxu0
        %v1659 = vadd.f32 %v1522, %v1640
        %v1660 = vadd.f32 %v1523, %v1642
        %v1661 = vadd.f32 %v1524, %v1645
        %v1662 = vadd.f32 %v1525, %v1647
        %v1663 = vadd.f32 %v1526, %v1650
        %v1664 = vadd.f32 %v1527, %v1652
        %v1665 = vadd.f32 %v1528, %v1655
        %v1666 = vadd.f32 %v1529, %v1657
        %v1667 = vld [vmem:[%s1395] sm:$0xf]
        %v1668 = vld [vmem:[%s1395 + $0x4] sm:$0x1]
        %v1669 = vld [vmem:[%s1395 + $0x8] sm:$0xf]
        %v1670 = vld [vmem:[%s1395 + $0xc] sm:$0x1]
        %v1671 = vld [vmem:[%s1395 + $0x10] sm:$0xf]
        %v1672 = vld [vmem:[%s1395 + $0x14] sm:$0x1]
        %v1673 = vld [vmem:[%s1395 + $0x18] sm:$0xf]
        %v1674 = vld [vmem:[%s1395 + $0x1c] sm:$0x1]
        %v1675 = vld [vmem:[%s1395 + $0x20] sm:$0xf]
        %v1676 = vld [vmem:[%s1395 + $0x24] sm:$0x1]
        %v1677 = vld [vmem:[%s1395 + $0x28] sm:$0xf]
        %v1678 = vld [vmem:[%s1395 + $0x2c] sm:$0x1]
        %v1679 = vld [vmem:[%s1395 + $0x30] sm:$0xf]
        %v1680 = vld [vmem:[%s1395 + $0x34] sm:$0x1]
        %v1681 = vld [vmem:[%s1395 + $0x38] sm:$0xf]
        %v1682 = vld [vmem:[%s1395 + $0x3c] sm:$0x1]
        %v1684 = vshrl.u32 %v1667, 16
        %v1686 = vrot.slane %v1684, 4
        %v1687 = vshll.u32 %v1667, 16
        %v1689 = vrot.slane %v1687, 5
        %v1690 = vor.u32 %v1686, %v1689
        %v1691 = vrot.slane %v1690, 4
        %v1693 = vshll.u32 %v1668, 16
        %v1695 = vrot.slane %v1693, 5
        %v1696 = vsel %vm1162, %v1691, %v1695
        %v1698 = vshrl.u32 %v1669, 16
        %v1700 = vrot.slane %v1698, 4
        %v1701 = vshll.u32 %v1669, 16
        %v1703 = vrot.slane %v1701, 5
        %v1704 = vor.u32 %v1700, %v1703
        %v1705 = vrot.slane %v1704, 4
        %v1707 = vshll.u32 %v1670, 16
        %v1709 = vrot.slane %v1707, 5
        %v1710 = vsel %vm1162, %v1705, %v1709
        %v1712 = vshrl.u32 %v1671, 16
        %v1714 = vrot.slane %v1712, 4
        %v1715 = vshll.u32 %v1671, 16
        %v1717 = vrot.slane %v1715, 5
        %v1718 = vor.u32 %v1714, %v1717
        %v1719 = vrot.slane %v1718, 4
        %v1721 = vshll.u32 %v1672, 16
        %v1723 = vrot.slane %v1721, 5
        %v1724 = vsel %vm1162, %v1719, %v1723
        %v1726 = vshrl.u32 %v1673, 16
        %v1728 = vrot.slane %v1726, 4
        %v1729 = vshll.u32 %v1673, 16
        %v1731 = vrot.slane %v1729, 5
        %v1732 = vor.u32 %v1728, %v1731
        %v1733 = vrot.slane %v1732, 4
        %v1735 = vshll.u32 %v1674, 16
        %v1737 = vrot.slane %v1735, 5
        %v1738 = vsel %vm1162, %v1733, %v1737
        %v1740 = vshrl.u32 %v1675, 16
        %v1742 = vrot.slane %v1740, 4
        %v1743 = vshll.u32 %v1675, 16
        %v1745 = vrot.slane %v1743, 5
        %v1746 = vor.u32 %v1742, %v1745
        %v1747 = vrot.slane %v1746, 4
        %v1749 = vshll.u32 %v1676, 16
        %v1751 = vrot.slane %v1749, 5
        %v1752 = vsel %vm1162, %v1747, %v1751
        %v1754 = vshrl.u32 %v1677, 16
        %v1756 = vrot.slane %v1754, 4
        %v1757 = vshll.u32 %v1677, 16
        %v1759 = vrot.slane %v1757, 5
        %v1760 = vor.u32 %v1756, %v1759
        %v1761 = vrot.slane %v1760, 4
        %v1763 = vshll.u32 %v1678, 16
        %v1765 = vrot.slane %v1763, 5
        %v1766 = vsel %vm1162, %v1761, %v1765
        %v1768 = vshrl.u32 %v1679, 16
        %v1770 = vrot.slane %v1768, 4
        %v1771 = vshll.u32 %v1679, 16
        %v1773 = vrot.slane %v1771, 5
        %v1774 = vor.u32 %v1770, %v1773
        %v1775 = vrot.slane %v1774, 4
        %v1777 = vshll.u32 %v1680, 16
        %v1779 = vrot.slane %v1777, 5
        %v1780 = vsel %vm1162, %v1775, %v1779
        %v1782 = vshrl.u32 %v1681, 16
        %v1784 = vrot.slane %v1782, 4
        %v1785 = vshll.u32 %v1681, 16
        %v1787 = vrot.slane %v1785, 5
        %v1788 = vor.u32 %v1784, %v1787
        %v1789 = vrot.slane %v1788, 4
        %v1791 = vshll.u32 %v1682, 16
        %v1793 = vrot.slane %v1791, 5
        %v1794 = vsel %vm1162, %v1789, %v1793
        %s1795 = scalar_lea.vmem %s1, 320
        %v1796 = vld [vmem:[%s1795] sm:$0xf]
        %v1797 = vld [vmem:[%s1795 + $0x4] sm:$0xf]
        %v1798 = vld [vmem:[%s1795 + $0x8] sm:$0xf]
        %v1799 = vld [vmem:[%s1795 + $0xc] sm:$0xf]
        %v1800 = vld [vmem:[%s1795 + $0x10] sm:$0xf]
        %v1801 = vld [vmem:[%s1795 + $0x14] sm:$0xf]
        %v1802 = vld [vmem:[%s1795 + $0x18] sm:$0xf]
        %v1803 = vld [vmem:[%s1795 + $0x1c] sm:$0xf]
        %v1804 = vld [vmem:[%s1795 + $0x20] sm:$0xf]
        %v1805 = vld [vmem:[%s1795 + $0x24] sm:$0xf]
        %v1806 = vld [vmem:[%s1795 + $0x28] sm:$0xf]
        %v1807 = vld [vmem:[%s1795 + $0x2c] sm:$0xf]
        %v1808 = vld [vmem:[%s1795 + $0x30] sm:$0xf]
        %v1809 = vld [vmem:[%s1795 + $0x34] sm:$0xf]
        %v1810 = vld [vmem:[%s1795 + $0x38] sm:$0xf]
        %v1811 = vld [vmem:[%s1795 + $0x3c] sm:$0xf]
        %v1812 = vunpack.c.l.b16 %v1696
        %v1813 = vunpack.c.l.b16 %v1710
        %v1814 = vunpack.c.l.b16 %v1724
        %v1815 = vunpack.c.l.b16 %v1738
        %v1816 = vunpack.c.l.b16 %v1752
        %v1817 = vunpack.c.l.b16 %v1766
        %v1818 = vunpack.c.l.b16 %v1780
        %v1819 = vunpack.c.l.b16 %v1794
        %v1820 = vpack.c.b16 %v1813, %v1812
        %v1821 = vpack.c.b16 %v1815, %v1814
        %v1822 = vpack.c.b16 %v1817, %v1816
        %v1823 = vpack.c.b16 %v1819, %v1818
        %v1844 = vunpack.c.l.b16 %v1796
        %v1845 = vunpack.c.l.b16 %v1797
        %v1846 = vunpack.c.l.b16 %v1798
        %v1847 = vunpack.c.l.b16 %v1799
        %v1848 = vunpack.c.l.b16 %v1800
        %v1849 = vunpack.c.l.b16 %v1801
        %v1850 = vunpack.c.l.b16 %v1802
        %v1851 = vunpack.c.l.b16 %v1803
        %v1852 = vunpack.c.l.b16 %v1804
        %v1853 = vunpack.c.l.b16 %v1805
        %v1854 = vunpack.c.l.b16 %v1806
        %v1855 = vunpack.c.l.b16 %v1807
        %v1856 = vunpack.c.l.b16 %v1808
        %v1857 = vunpack.c.l.b16 %v1809
        %v1858 = vunpack.c.l.b16 %v1810
        %v1859 = vunpack.c.l.b16 %v1811
        %v1860 = vpack.c.b16 %v1845, %v1844
        %v1861 = vpack.c.b16 %v1847, %v1846
        %v1862 = vpack.c.b16 %v1849, %v1848
        %v1863 = vpack.c.b16 %v1851, %v1850
        %v1864 = vpack.c.b16 %v1853, %v1852
        %v1865 = vpack.c.b16 %v1855, %v1854
        %v1866 = vpack.c.b16 %v1857, %v1856
        %v1867 = vpack.c.b16 %v1859, %v1858
        %1876 = vmatpush.bf16.msra.mxu0 %v1867
        %1877 = vmatpush.bf16.msra.mxu0 %v1866
        %1878 = vmatpush.bf16.msra.mxu0 %v1865
        %1879 = vmatpush.bf16.msra.mxu0 %v1864
        %1880 = vmatpush.bf16.msra.mxu0 %v1863
        %1881 = vmatpush.bf16.msra.mxu0 %v1862
        %1882 = vmatpush.bf16.msra.mxu0 %v1861
        %1883 = vmatpush.bf16.msra.mxu0 %v1860
        %1884 = vmatmul.bf16.gmra.mxu0 %v1820
        %v1885 = vpop.f32.mrf.mxu0
        %v1886 = vadd.f32 0.0, %v1885
        %v1887 = vpop.f32.mrf.mxu0
        %v1888 = vadd.f32 0.0, %v1887
        %1889 = vmatmul.bf16.gmra.mxu0 %v1821
        %v1890 = vpop.f32.mrf.mxu0
        %v1891 = vadd.f32 0.0, %v1890
        %v1892 = vpop.f32.mrf.mxu0
        %v1893 = vadd.f32 0.0, %v1892
        %1894 = vmatmul.bf16.gmra.mxu0 %v1822
        %v1895 = vpop.f32.mrf.mxu0
        %v1896 = vadd.f32 0.0, %v1895
        %v1897 = vpop.f32.mrf.mxu0
        %v1898 = vadd.f32 0.0, %v1897
        %1899 = vmatmul.bf16.gmra.mxu0 %v1823
        %v1900 = vpop.f32.mrf.mxu0
        %v1901 = vadd.f32 0.0, %v1900
        %v1902 = vpop.f32.mrf.mxu0
        %v1903 = vadd.f32 0.0, %v1902
        %1904 = vdwg.mxu0
        %v1905 = vadd.f32 %v1659, %v1886
        %v1906 = vadd.f32 %v1660, %v1888
        %v1907 = vadd.f32 %v1661, %v1891
        %v1908 = vadd.f32 %v1662, %v1893
        %v1909 = vadd.f32 %v1663, %v1896
        %v1910 = vadd.f32 %v1664, %v1898
        %v1911 = vadd.f32 %v1665, %v1901
        %v1912 = vadd.f32 %v1666, %v1903
        %s1913 = sadd.s32 %s886, 1
        %s1914 = smul.u32 %s1913, 2
        %s1915 = smul.addr %s1914, 4
        %s1916 = scalar_lea.vmem [#allocation2], %s1915
        %v1917 = vld [vmem:[%s1916] sm:$0xf]
        %v1918 = vld [vmem:[%s1916 + $0x8] sm:$0xf]
        %v1919 = vld [vmem:[%s1916 + $0x10] sm:$0xf]
        %v1920 = vld [vmem:[%s1916 + $0x18] sm:$0xf]
        %v1921 = vld [vmem:[%s1916 + $0x20] sm:$0xf]
        %v1922 = vld [vmem:[%s1916 + $0x28] sm:$0xf]
        %v1923 = vld [vmem:[%s1916 + $0x30] sm:$0xf]
        %v1924 = vld [vmem:[%s1916 + $0x38] sm:$0xf]
        %s1925 = scalar_lea.vmem %s1, 384
        %v1926 = vld [vmem:[%s1925] sm:$0xf]
        %v1927 = vld [vmem:[%s1925 + $0x4] sm:$0xf]
        %v1928 = vld [vmem:[%s1925 + $0x8] sm:$0xf]
        %v1929 = vld [vmem:[%s1925 + $0xc] sm:$0xf]
        %v1930 = vld [vmem:[%s1925 + $0x10] sm:$0xf]
        %v1931 = vld [vmem:[%s1925 + $0x14] sm:$0xf]
        %v1932 = vld [vmem:[%s1925 + $0x18] sm:$0xf]
        %v1933 = vld [vmem:[%s1925 + $0x1c] sm:$0xf]
        %v1934 = vld [vmem:[%s1925 + $0x20] sm:$0xf]
        %v1935 = vld [vmem:[%s1925 + $0x24] sm:$0xf]
        %v1936 = vld [vmem:[%s1925 + $0x28] sm:$0xf]
        %v1937 = vld [vmem:[%s1925 + $0x2c] sm:$0xf]
        %v1938 = vld [vmem:[%s1925 + $0x30] sm:$0xf]
        %v1939 = vld [vmem:[%s1925 + $0x34] sm:$0xf]
        %v1940 = vld [vmem:[%s1925 + $0x38] sm:$0xf]
        %v1941 = vld [vmem:[%s1925 + $0x3c] sm:$0xf]
        %v1950 = vunpack.c.l.b16 %v1917
        %v1951 = vunpack.c.l.b16 %v1918
        %v1952 = vunpack.c.l.b16 %v1919
        %v1953 = vunpack.c.l.b16 %v1920
        %v1954 = vunpack.c.l.b16 %v1921
        %v1955 = vunpack.c.l.b16 %v1922
        %v1956 = vunpack.c.l.b16 %v1923
        %v1957 = vunpack.c.l.b16 %v1924
        %v1958 = vpack.c.b16 %v1951, %v1950
        %v1959 = vpack.c.b16 %v1953, %v1952
        %v1960 = vpack.c.b16 %v1955, %v1954
        %v1961 = vpack.c.b16 %v1957, %v1956
        %v1982 = vunpack.c.l.b16 %v1926
        %v1983 = vunpack.c.l.b16 %v1927
        %v1984 = vunpack.c.l.b16 %v1928
        %v1985 = vunpack.c.l.b16 %v1929
        %v1986 = vunpack.c.l.b16 %v1930
        %v1987 = vunpack.c.l.b16 %v1931
        %v1988 = vunpack.c.l.b16 %v1932
        %v1989 = vunpack.c.l.b16 %v1933
        %v1990 = vunpack.c.l.b16 %v1934
        %v1991 = vunpack.c.l.b16 %v1935
        %v1992 = vunpack.c.l.b16 %v1936
        %v1993 = vunpack.c.l.b16 %v1937
        %v1994 = vunpack.c.l.b16 %v1938
        %v1995 = vunpack.c.l.b16 %v1939
        %v1996 = vunpack.c.l.b16 %v1940
        %v1997 = vunpack.c.l.b16 %v1941
        %v1998 = vpack.c.b16 %v1983, %v1982
        %v1999 = vpack.c.b16 %v1985, %v1984
        %v2000 = vpack.c.b16 %v1987, %v1986
        %v2001 = vpack.c.b16 %v1989, %v1988
        %v2002 = vpack.c.b16 %v1991, %v1990
        %v2003 = vpack.c.b16 %v1993, %v1992
        %v2004 = vpack.c.b16 %v1995, %v1994
        %v2005 = vpack.c.b16 %v1997, %v1996
        %2014 = vmatpush.bf16.msra.mxu0 %v2005
        %2015 = vmatpush.bf16.msra.mxu0 %v2004
        %2016 = vmatpush.bf16.msra.mxu0 %v2003
        %2017 = vmatpush.bf16.msra.mxu0 %v2002
        %2018 = vmatpush.bf16.msra.mxu0 %v2001
        %2019 = vmatpush.bf16.msra.mxu0 %v2000
        %2020 = vmatpush.bf16.msra.mxu0 %v1999
        %2021 = vmatpush.bf16.msra.mxu0 %v1998
        %2022 = vmatmul.bf16.gmra.mxu0 %v1958
        %v2023 = vpop.f32.mrf.mxu0
        %v2024 = vadd.f32 0.0, %v2023
        %v2025 = vpop.f32.mrf.mxu0
        %v2026 = vadd.f32 0.0, %v2025
        %2027 = vmatmul.bf16.gmra.mxu0 %v1959
        %v2028 = vpop.f32.mrf.mxu0
        %v2029 = vadd.f32 0.0, %v2028
        %v2030 = vpop.f32.mrf.mxu0
        %v2031 = vadd.f32 0.0, %v2030
        %2032 = vmatmul.bf16.gmra.mxu0 %v1960
        %v2033 = vpop.f32.mrf.mxu0
        %v2034 = vadd.f32 0.0, %v2033
        %v2035 = vpop.f32.mrf.mxu0
        %v2036 = vadd.f32 0.0, %v2035
        %2037 = vmatmul.bf16.gmra.mxu0 %v1961
        %v2038 = vpop.f32.mrf.mxu0
        %v2039 = vadd.f32 0.0, %v2038
        %v2040 = vpop.f32.mrf.mxu0
        %v2041 = vadd.f32 0.0, %v2040
        %2042 = vdwg.mxu0
        %v2043 = vadd.f32 %v1905, %v2024
        %v2044 = vadd.f32 %v1906, %v2026
        %v2045 = vadd.f32 %v1907, %v2029
        %v2046 = vadd.f32 %v1908, %v2031
        %v2047 = vadd.f32 %v1909, %v2034
        %v2048 = vadd.f32 %v1910, %v2036
        %v2049 = vadd.f32 %v1911, %v2039
        %v2050 = vadd.f32 %v1912, %v2041
        %s2051 = sadd.s32 %s1914, 18
        %s2052 = smul.addr %s2051, 4
        %s2053 = scalar_lea.vmem [#allocation2], %s2052
        %v2054 = vld [vmem:[%s2053] sm:$0xf]
        %v2055 = vld [vmem:[%s2053 + $0x8] sm:$0xf]
        %v2056 = vld [vmem:[%s2053 + $0x10] sm:$0xf]
        %v2057 = vld [vmem:[%s2053 + $0x18] sm:$0xf]
        %v2058 = vld [vmem:[%s2053 + $0x20] sm:$0xf]
        %v2059 = vld [vmem:[%s2053 + $0x28] sm:$0xf]
        %v2060 = vld [vmem:[%s2053 + $0x30] sm:$0xf]
        %v2061 = vld [vmem:[%s2053 + $0x38] sm:$0xf]
        %s2062 = scalar_lea.vmem %s1, 448
        %v2063 = vld [vmem:[%s2062] sm:$0xf]
        %v2064 = vld [vmem:[%s2062 + $0x4] sm:$0xf]
        %v2065 = vld [vmem:[%s2062 + $0x8] sm:$0xf]
        %v2066 = vld [vmem:[%s2062 + $0xc] sm:$0xf]
        %v2067 = vld [vmem:[%s2062 + $0x10] sm:$0xf]
        %v2068 = vld [vmem:[%s2062 + $0x14] sm:$0xf]
        %v2069 = vld [vmem:[%s2062 + $0x18] sm:$0xf]
        %v2070 = vld [vmem:[%s2062 + $0x1c] sm:$0xf]
        %v2071 = vld [vmem:[%s2062 + $0x20] sm:$0xf]
        %v2072 = vld [vmem:[%s2062 + $0x24] sm:$0xf]
        %v2073 = vld [vmem:[%s2062 + $0x28] sm:$0xf]
        %v2074 = vld [vmem:[%s2062 + $0x2c] sm:$0xf]
        %v2075 = vld [vmem:[%s2062 + $0x30] sm:$0xf]
        %v2076 = vld [vmem:[%s2062 + $0x34] sm:$0xf]
        %v2077 = vld [vmem:[%s2062 + $0x38] sm:$0xf]
        %v2078 = vld [vmem:[%s2062 + $0x3c] sm:$0xf]
        %v2087 = vunpack.c.l.b16 %v2054
        %v2088 = vunpack.c.l.b16 %v2055
        %v2089 = vunpack.c.l.b16 %v2056
        %v2090 = vunpack.c.l.b16 %v2057
        %v2091 = vunpack.c.l.b16 %v2058
        %v2092 = vunpack.c.l.b16 %v2059
        %v2093 = vunpack.c.l.b16 %v2060
        %v2094 = vunpack.c.l.b16 %v2061
        %v2095 = vpack.c.b16 %v2088, %v2087
        %v2096 = vpack.c.b16 %v2090, %v2089
        %v2097 = vpack.c.b16 %v2092, %v2091
        %v2098 = vpack.c.b16 %v2094, %v2093
        %v2119 = vunpack.c.l.b16 %v2063
        %v2120 = vunpack.c.l.b16 %v2064
        %v2121 = vunpack.c.l.b16 %v2065
        %v2122 = vunpack.c.l.b16 %v2066
        %v2123 = vunpack.c.l.b16 %v2067
        %v2124 = vunpack.c.l.b16 %v2068
        %v2125 = vunpack.c.l.b16 %v2069
        %v2126 = vunpack.c.l.b16 %v2070
        %v2127 = vunpack.c.l.b16 %v2071
        %v2128 = vunpack.c.l.b16 %v2072
        %v2129 = vunpack.c.l.b16 %v2073
        %v2130 = vunpack.c.l.b16 %v2074
        %v2131 = vunpack.c.l.b16 %v2075
        %v2132 = vunpack.c.l.b16 %v2076
        %v2133 = vunpack.c.l.b16 %v2077
        %v2134 = vunpack.c.l.b16 %v2078
        %v2135 = vpack.c.b16 %v2120, %v2119
        %v2136 = vpack.c.b16 %v2122, %v2121
        %v2137 = vpack.c.b16 %v2124, %v2123
        %v2138 = vpack.c.b16 %v2126, %v2125
        %v2139 = vpack.c.b16 %v2128, %v2127
        %v2140 = vpack.c.b16 %v2130, %v2129
        %v2141 = vpack.c.b16 %v2132, %v2131
        %v2142 = vpack.c.b16 %v2134, %v2133
        %2151 = vmatpush.bf16.msra.mxu0 %v2142
        %2152 = vmatpush.bf16.msra.mxu0 %v2141
        %2153 = vmatpush.bf16.msra.mxu0 %v2140
        %2154 = vmatpush.bf16.msra.mxu0 %v2139
        %2155 = vmatpush.bf16.msra.mxu0 %v2138
        %2156 = vmatpush.bf16.msra.mxu0 %v2137
        %2157 = vmatpush.bf16.msra.mxu0 %v2136
        %2158 = vmatpush.bf16.msra.mxu0 %v2135
        %2159 = vmatmul.bf16.gmra.mxu0 %v2095
        %v2160 = vpop.f32.mrf.mxu0
        %v2161 = vadd.f32 0.0, %v2160
        %v2162 = vpop.f32.mrf.mxu0
        %v2163 = vadd.f32 0.0, %v2162
        %2164 = vmatmul.bf16.gmra.mxu0 %v2096
        %v2165 = vpop.f32.mrf.mxu0
        %v2166 = vadd.f32 0.0, %v2165
        %v2167 = vpop.f32.mrf.mxu0
        %v2168 = vadd.f32 0.0, %v2167
        %2169 = vmatmul.bf16.gmra.mxu0 %v2097
        %v2170 = vpop.f32.mrf.mxu0
        %v2171 = vadd.f32 0.0, %v2170
        %v2172 = vpop.f32.mrf.mxu0
        %v2173 = vadd.f32 0.0, %v2172
        %2174 = vmatmul.bf16.gmra.mxu0 %v2098
        %v2175 = vpop.f32.mrf.mxu0
        %v2176 = vadd.f32 0.0, %v2175
        %v2177 = vpop.f32.mrf.mxu0
        %v2178 = vadd.f32 0.0, %v2177
        %2179 = vdwg.mxu0
        %v2180 = vadd.f32 %v2043, %v2161
        %v2181 = vadd.f32 %v2044, %v2163
        %v2182 = vadd.f32 %v2045, %v2166
        %v2183 = vadd.f32 %v2046, %v2168
        %v2184 = vadd.f32 %v2047, %v2171
        %v2185 = vadd.f32 %v2048, %v2173
        %v2186 = vadd.f32 %v2049, %v2176
        %v2187 = vadd.f32 %v2050, %v2178
        %v2188 = vld [vmem:[%s1916] sm:$0xf]
        %v2189 = vld [vmem:[%s1916 + $0x4] sm:$0x1]
        %v2190 = vld [vmem:[%s1916 + $0x8] sm:$0xf]
        %v2191 = vld [vmem:[%s1916 + $0xc] sm:$0x1]
        %v2192 = vld [vmem:[%s1916 + $0x10] sm:$0xf]
        %v2193 = vld [vmem:[%s1916 + $0x14] sm:$0x1]
        %v2194 = vld [vmem:[%s1916 + $0x18] sm:$0xf]
        %v2195 = vld [vmem:[%s1916 + $0x1c] sm:$0x1]
        %v2196 = vld [vmem:[%s1916 + $0x20] sm:$0xf]
        %v2197 = vld [vmem:[%s1916 + $0x24] sm:$0x1]
        %v2198 = vld [vmem:[%s1916 + $0x28] sm:$0xf]
        %v2199 = vld [vmem:[%s1916 + $0x2c] sm:$0x1]
        %v2200 = vld [vmem:[%s1916 + $0x30] sm:$0xf]
        %v2201 = vld [vmem:[%s1916 + $0x34] sm:$0x1]
        %v2202 = vld [vmem:[%s1916 + $0x38] sm:$0xf]
        %v2203 = vld [vmem:[%s1916 + $0x3c] sm:$0x1]
        %v2205 = vshrl.u32 %v2188, 16
        %v2207 = vrot.slane %v2205, 4
        %v2208 = vshll.u32 %v2188, 16
        %v2210 = vrot.slane %v2208, 5
        %v2211 = vor.u32 %v2207, %v2210
        %v2212 = vrot.slane %v2211, 4
        %v2214 = vshll.u32 %v2189, 16
        %v2216 = vrot.slane %v2214, 5
        %v2217 = vsel %vm1162, %v2212, %v2216
        %v2219 = vshrl.u32 %v2190, 16
        %v2221 = vrot.slane %v2219, 4
        %v2222 = vshll.u32 %v2190, 16
        %v2224 = vrot.slane %v2222, 5
        %v2225 = vor.u32 %v2221, %v2224
        %v2226 = vrot.slane %v2225, 4
        %v2228 = vshll.u32 %v2191, 16
        %v2230 = vrot.slane %v2228, 5
        %v2231 = vsel %vm1162, %v2226, %v2230
        %v2233 = vshrl.u32 %v2192, 16
        %v2235 = vrot.slane %v2233, 4
        %v2236 = vshll.u32 %v2192, 16
        %v2238 = vrot.slane %v2236, 5
        %v2239 = vor.u32 %v2235, %v2238
        %v2240 = vrot.slane %v2239, 4
        %v2242 = vshll.u32 %v2193, 16
        %v2244 = vrot.slane %v2242, 5
        %v2245 = vsel %vm1162, %v2240, %v2244
        %v2247 = vshrl.u32 %v2194, 16
        %v2249 = vrot.slane %v2247, 4
        %v2250 = vshll.u32 %v2194, 16
        %v2252 = vrot.slane %v2250, 5
        %v2253 = vor.u32 %v2249, %v2252
        %v2254 = vrot.slane %v2253, 4
        %v2256 = vshll.u32 %v2195, 16
        %v2258 = vrot.slane %v2256, 5
        %v2259 = vsel %vm1162, %v2254, %v2258
        %v2261 = vshrl.u32 %v2196, 16
        %v2263 = vrot.slane %v2261, 4
        %v2264 = vshll.u32 %v2196, 16
        %v2266 = vrot.slane %v2264, 5
        %v2267 = vor.u32 %v2263, %v2266
        %v2268 = vrot.slane %v2267, 4
        %v2270 = vshll.u32 %v2197, 16
        %v2272 = vrot.slane %v2270, 5
        %v2273 = vsel %vm1162, %v2268, %v2272
        %v2275 = vshrl.u32 %v2198, 16
        %v2277 = vrot.slane %v2275, 4
        %v2278 = vshll.u32 %v2198, 16
        %v2280 = vrot.slane %v2278, 5
        %v2281 = vor.u32 %v2277, %v2280
        %v2282 = vrot.slane %v2281, 4
        %v2284 = vshll.u32 %v2199, 16
        %v2286 = vrot.slane %v2284, 5
        %v2287 = vsel %vm1162, %v2282, %v2286
        %v2289 = vshrl.u32 %v2200, 16
        %v2291 = vrot.slane %v2289, 4
        %v2292 = vshll.u32 %v2200, 16
        %v2294 = vrot.slane %v2292, 5
        %v2295 = vor.u32 %v2291, %v2294
        %v2296 = vrot.slane %v2295, 4
        %v2298 = vshll.u32 %v2201, 16
        %v2300 = vrot.slane %v2298, 5
        %v2301 = vsel %vm1162, %v2296, %v2300
        %v2303 = vshrl.u32 %v2202, 16
        %v2305 = vrot.slane %v2303, 4
        %v2306 = vshll.u32 %v2202, 16
        %v2308 = vrot.slane %v2306, 5
        %v2309 = vor.u32 %v2305, %v2308
        %v2310 = vrot.slane %v2309, 4
        %v2312 = vshll.u32 %v2203, 16
        %v2314 = vrot.slane %v2312, 5
        %v2315 = vsel %vm1162, %v2310, %v2314
        %s2316 = scalar_lea.vmem %s1, 512
        %v2317 = vld [vmem:[%s2316] sm:$0xf]
        %v2318 = vld [vmem:[%s2316 + $0x4] sm:$0xf]
        %v2319 = vld [vmem:[%s2316 + $0x8] sm:$0xf]
        %v2320 = vld [vmem:[%s2316 + $0xc] sm:$0xf]
        %v2321 = vld [vmem:[%s2316 + $0x10] sm:$0xf]
        %v2322 = vld [vmem:[%s2316 + $0x14] sm:$0xf]
        %v2323 = vld [vmem:[%s2316 + $0x18] sm:$0xf]
        %v2324 = vld [vmem:[%s2316 + $0x1c] sm:$0xf]
        %v2325 = vld [vmem:[%s2316 + $0x20] sm:$0xf]
        %v2326 = vld [vmem:[%s2316 + $0x24] sm:$0xf]
        %v2327 = vld [vmem:[%s2316 + $0x28] sm:$0xf]
        %v2328 = vld [vmem:[%s2316 + $0x2c] sm:$0xf]
        %v2329 = vld [vmem:[%s2316 + $0x30] sm:$0xf]
        %v2330 = vld [vmem:[%s2316 + $0x34] sm:$0xf]
        %v2331 = vld [vmem:[%s2316 + $0x38] sm:$0xf]
        %v2332 = vld [vmem:[%s2316 + $0x3c] sm:$0xf]
        %v2333 = vunpack.c.l.b16 %v2217
        %v2334 = vunpack.c.l.b16 %v2231
        %v2335 = vunpack.c.l.b16 %v2245
        %v2336 = vunpack.c.l.b16 %v2259
        %v2337 = vunpack.c.l.b16 %v2273
        %v2338 = vunpack.c.l.b16 %v2287
        %v2339 = vunpack.c.l.b16 %v2301
        %v2340 = vunpack.c.l.b16 %v2315
        %v2341 = vpack.c.b16 %v2334, %v2333
        %v2342 = vpack.c.b16 %v2336, %v2335
        %v2343 = vpack.c.b16 %v2338, %v2337
        %v2344 = vpack.c.b16 %v2340, %v2339
        %v2365 = vunpack.c.l.b16 %v2317
        %v2366 = vunpack.c.l.b16 %v2318
        %v2367 = vunpack.c.l.b16 %v2319
        %v2368 = vunpack.c.l.b16 %v2320
        %v2369 = vunpack.c.l.b16 %v2321
        %v2370 = vunpack.c.l.b16 %v2322
        %v2371 = vunpack.c.l.b16 %v2323
        %v2372 = vunpack.c.l.b16 %v2324
        %v2373 = vunpack.c.l.b16 %v2325
        %v2374 = vunpack.c.l.b16 %v2326
        %v2375 = vunpack.c.l.b16 %v2327
        %v2376 = vunpack.c.l.b16 %v2328
        %v2377 = vunpack.c.l.b16 %v2329
        %v2378 = vunpack.c.l.b16 %v2330
        %v2379 = vunpack.c.l.b16 %v2331
        %v2380 = vunpack.c.l.b16 %v2332
        %v2381 = vpack.c.b16 %v2366, %v2365
        %v2382 = vpack.c.b16 %v2368, %v2367
        %v2383 = vpack.c.b16 %v2370, %v2369
        %v2384 = vpack.c.b16 %v2372, %v2371
        %v2385 = vpack.c.b16 %v2374, %v2373
        %v2386 = vpack.c.b16 %v2376, %v2375
        %v2387 = vpack.c.b16 %v2378, %v2377
        %v2388 = vpack.c.b16 %v2380, %v2379
        %2397 = vmatpush.bf16.msra.mxu0 %v2388
        %2398 = vmatpush.bf16.msra.mxu0 %v2387
        %2399 = vmatpush.bf16.msra.mxu0 %v2386
        %2400 = vmatpush.bf16.msra.mxu0 %v2385
        %2401 = vmatpush.bf16.msra.mxu0 %v2384
        %2402 = vmatpush.bf16.msra.mxu0 %v2383
        %2403 = vmatpush.bf16.msra.mxu0 %v2382
        %2404 = vmatpush.bf16.msra.mxu0 %v2381
        %2405 = vmatmul.bf16.gmra.mxu0 %v2341
        %v2406 = vpop.f32.mrf.mxu0
        %v2407 = vadd.f32 0.0, %v2406
        %v2408 = vpop.f32.mrf.mxu0
        %v2409 = vadd.f32 0.0, %v2408
        %2410 = vmatmul.bf16.gmra.mxu0 %v2342
        %v2411 = vpop.f32.mrf.mxu0
        %v2412 = vadd.f32 0.0, %v2411
        %v2413 = vpop.f32.mrf.mxu0
        %v2414 = vadd.f32 0.0, %v2413
        %2415 = vmatmul.bf16.gmra.mxu0 %v2343
        %v2416 = vpop.f32.mrf.mxu0
        %v2417 = vadd.f32 0.0, %v2416
        %v2418 = vpop.f32.mrf.mxu0
        %v2419 = vadd.f32 0.0, %v2418
        %2420 = vmatmul.bf16.gmra.mxu0 %v2344
        %v2421 = vpop.f32.mrf.mxu0
        %v2422 = vadd.f32 0.0, %v2421
        %v2423 = vpop.f32.mrf.mxu0
        %v2424 = vadd.f32 0.0, %v2423
        %2425 = vdwg.mxu0
        %v2426 = vadd.f32 %v2180, %v2407
        %v2427 = vadd.f32 %v2181, %v2409
        %v2428 = vadd.f32 %v2182, %v2412
        %v2429 = vadd.f32 %v2183, %v2414
        %v2430 = vadd.f32 %v2184, %v2417
        %v2431 = vadd.f32 %v2185, %v2419
        %v2432 = vadd.f32 %v2186, %v2422
        %v2433 = vadd.f32 %v2187, %v2424
        %v2434 = vld [vmem:[%s4] sm:$0x1]
        %v2436 = vperm.slane %v2434, 0
        %v2438 = vmul.f32 %v2426, %v2436
        %v2439 = vmul.f32 %v2427, %v2436
        %v2440 = vmul.f32 %v2428, %v2436
        %v2441 = vmul.f32 %v2429, %v2436
        %v2442 = vmul.f32 %v2430, %v2436
        %v2443 = vmul.f32 %v2431, %v2436
        %v2444 = vmul.f32 %v2432, %v2436
        %v2445 = vmul.f32 %v2433, %v2436
        %v2446 = vld [vmem:[%s5] sm:$0x1]
        %v2448 = vperm.slane %v2446, 0
        %v2450 = vadd.f32 %v2438, %v2448
        %v2451 = vadd.f32 %v2439, %v2448
        %v2452 = vadd.f32 %v2440, %v2448
        %v2453 = vadd.f32 %v2441, %v2448
        %v2454 = vadd.f32 %v2442, %v2448
        %v2455 = vadd.f32 %v2443, %v2448
        %v2456 = vadd.f32 %v2444, %v2448
        %v2457 = vadd.f32 %v2445, %v2448
        %v2458 = vmax.f32 %v2450, 0.0
        %v2459 = vmax.f32 %v2451, 0.0
        %v2460 = vmax.f32 %v2452, 0.0
        %v2461 = vmax.f32 %v2453, 0.0
        %v2462 = vmax.f32 %v2454, 0.0
        %v2463 = vmax.f32 %v2455, 0.0
        %v2464 = vmax.f32 %v2456, 0.0
        %v2465 = vmax.f32 %v2457, 0.0
        %v2466 = vpack.c.bf16 %v2458, %v2458
        %v2467 = vpack.c.bf16 %v2459, %v2459
        %v2468 = vpack.c.bf16 %v2460, %v2460
        %v2469 = vpack.c.bf16 %v2461, %v2461
        %v2470 = vpack.c.bf16 %v2462, %v2462
        %v2471 = vpack.c.bf16 %v2463, %v2463
        %v2472 = vpack.c.bf16 %v2464, %v2464
        %v2473 = vpack.c.bf16 %v2465, %v2465
        %2474 = vst [vmem:[%s258] sm:$0xf] %v2466
        %2475 = vst [vmem:[%s258 + $0x4] sm:$0xf] %v2467
        %2476 = vst [vmem:[%s258 + $0x8] sm:$0xf] %v2468
        %2477 = vst [vmem:[%s258 + $0xc] sm:$0xf] %v2469
        %2478 = vst [vmem:[%s258 + $0x10] sm:$0xf] %v2470
        %2479 = vst [vmem:[%s258 + $0x14] sm:$0xf] %v2471
        %2480 = vst [vmem:[%s258 + $0x18] sm:$0xf] %v2472
        %2481 = vst [vmem:[%s258 + $0x1c] sm:$0xf] %v2473
        %s2482 = sand.u32 %s173, 1
        %s2483 = scalar_lea.sflag [#allocation4], %s2482
        %s2484 = sand.u32 %s173, 1
        %s2485 = smul.addr %s2484, 32
        %s2486 = scalar_lea.vmem [#allocation3], %s2485
        // Predicated region
        $region45: #{tpu_custom_call.1} parent=43 // pred_check
          %p2487 = pneg %p183
        $region46: #{tpu_custom_call.1} parent=43 // pred_check_branch
          %2489 = sbr.rel (%p2487) target = $region48
        $region47: #{tpu_custom_call.1} parent=43 // pred_region
          %s2490 = smul.u32 8, %s25
          %2492 = vsyncadd %s2483, 0
          %s2493 = smul.addr %s24, 8
          %s2494 = sadd.s32 %s2490, %s2493
          %s2495 = smul.addr %s2494, 4
          %s2496 = scalar_lea.hbm %s6, %s2495
          %s2497 = sshll.u32 %s2486, 4
          %s2498 = int_to_ptr.vmem [resolvable:$true] %s2497
          %s2499 = sshll.u32 %s2496, 4
          %s2500 = int_to_ptr.hbm [resolvable:$true] %s2499
          %2505 = dma.vmem_to_hbm [thread:$0]  %s2498, 512, %s2500, %s2483, 64, 64, 4
        $region48: #{tpu_custom_call.1} parent=43 // pred_fallthru
          _
      $region44: #{tpu_custom_call.1} parent=5 // pred_fallthru
        _
      %p2506 = scmp.le.s32.totalorder 2, %s15
      // Predicated region
      $region49: #{tpu_custom_call.1} parent=5 // pred_check
        %p2507 = pneg %p2506
      $region50: #{tpu_custom_call.1} parent=5 // pred_check_branch
        %2509 = sbr.rel (%p2507) target = $region52
      $region51: #{tpu_custom_call.1} parent=5 // pred_region
        %s2510 = ssub.s32 %s15, 2
        // Predicated region
        $region53: #{tpu_custom_call.1} parent=51 // pred_check
          %p2511 = pneg %p189
        $region54: #{tpu_custom_call.1} parent=51 // pred_check_branch
          %2513 = sbr.rel (%p2511) target = $region56
        $region55: #{tpu_custom_call.1} parent=51 // pred_region
          %s2514 = sand.u32 %s174, 1
          %s2515 = scalar_lea.sflag [#allocation4], %s2514
          %s2516 = sand.u32 %s174, 1
          %s2517 = smul.addr %s2516, 32
          %s2518 = scalar_lea.vmem [#allocation3], %s2517
          %2520 = dma.done %s2515, 512
        $region56: #{tpu_custom_call.1} parent=51 // pred_fallthru
          _
      $region52: #{tpu_custom_call.1} parent=5 // pred_fallthru
        _
    $region6: #{tpu_custom_call.1} parent=1 // loop_footer
      %s19 = sadd.s32 1, %s15
    $region7: #{tpu_custom_call.1} parent=1 // loop_footer_branch
      %14 = sbr.rel target = $region3
    $region8: #{tpu_custom_call.1} parent=1 // loop_exit
      _
    %2521 = vsyncpa [#allocation4], 1
    %s2522 = scalar_lea.sflag [#allocation4], 1
    %2523 = vsyncpa %s2522, 1

</llo_original>
